<compile_context>
chip_gen: v5e
topology: v5e:2x2
jax: 0.10.0
libtpu: 0.0.40
codegen_flags: <defaults>
</compile_context>

<pallas_src>
import functools

import jax
import jax.numpy as jnp
from jax.experimental import pallas as pl
from jax.experimental.pallas import tpu as pltpu

_VMEM_LIMIT = 32 * 1024 * 1024  # comfortably under v5e/v6e/v7x scoped budgets


def _cparams(n_parallel):
    return pltpu.CompilerParams(
        dimension_semantics=("parallel",) * n_parallel,
        vmem_limit_bytes=_VMEM_LIMIT)


def _batch_block(n, cap=4):
    for b in range(min(n, cap), 0, -1):
        if n % b == 0:
            return b
    return 1


# --------------------------------------------------------------------------
# Big-K fused conv kernel: in-kernel window extraction from a VMEM-resident
# padded/parity activation block, one (B*Ho*Wo, T*Cin) x (T*Cin, Cout) dot,
# BN-shift / residual / ReLU epilogue.  Grid is batch-blocked.
# --------------------------------------------------------------------------
def _conv_bigk_kernel(planes_ref, w_ref, b_ref, *rest, taps, ho, wo, relu,
                      has_res):
    if has_res:
        res_ref, o_ref = rest
    else:
        (o_ref,) = rest
    nb = planes_ref.shape[1]
    cin = planes_ref.shape[-1]
    m = nb * ho * wo

    loaded = {}
    wins = []
    for (p, dy, dx) in taps:
        if p not in loaded:
            loaded[p] = planes_ref[p]          # (nb, hp, wp, cin) bf16, 1 read/plane
        wins.append(loaded[p][:, dy:dy + ho, dx:dx + wo, :])
    if len(wins) == 1:
        patches = wins[0]
    else:
        patches = jnp.concatenate(wins, axis=-1)   # (nb, ho, wo, T*cin)
    patches = patches.reshape(m, len(taps) * cin)  # lane dim unchanged, wo%8==0

    y = jnp.dot(patches, w_ref[...],               # single big-K MXU dot
                preferred_element_type=jnp.float32)
    y = y + b_ref[...]                             # folded-BN shift
    if has_res:
        y = y + res_ref[...].astype(jnp.float32)   # fused residual
    if relu:
        y = jnp.maximum(y, 0.0)
    o_ref[...] = y.astype(o_ref.dtype)             # bf16 out


def _conv_bigk(x, w, shift, *, stride, relu, residual, batch_block):
    n, h, wsp, cin = x.shape
    kdim, cout = w.shape
    tcount = kdim // cin
    ho, wo = h // stride, wsp // stride

    if tcount == 1:                       # 1x1 (shortcut) conv
        planes = x[:, ::stride, ::stride, :][None]
        taps = ((0, 0, 0),)
    elif stride == 1:                     # 3x3, pad=1, stride 1
        planes = jnp.pad(x, ((0, 0), (1, 1), (1, 1), (0, 0)))[None]
        taps = tuple((0, dy, dx) for dy in range(3) for dx in range(3))
    else:                                 # 3x3, pad=1, stride 2: parity planes
        xp = jnp.pad(x, ((0, 0), (1, 1), (1, 1), (0, 0)))
        planes = jnp.stack(
            [xp[:, p::2, q::2, :] for p in (0, 1) for q in (0, 1)])
        taps = tuple((2 * (dy % 2) + (dx % 2), dy // 2, dx // 2)
                     for dy in range(3) for dx in range(3))

    num_p, _, hp, wp, _ = planes.shape
    nb = batch_block
    mblk = nb * ho * wo
    m_total = n * ho * wo
    b2 = shift.reshape(1, cout)
    has_res = residual is not None

    in_specs = [
        pl.BlockSpec((num_p, nb, hp, wp, cin), lambda i: (0, i, 0, 0, 0)),
        pl.BlockSpec((kdim, cout), lambda i: (0, 0)),
        pl.BlockSpec((1, cout), lambda i: (0, 0)),
    ]
    args = [planes, w, b2]
    if has_res:
        in_specs.append(pl.BlockSpec((mblk, cout), lambda i: (i, 0)))
        args.append(residual)

    kern = functools.partial(_conv_bigk_kernel, taps=taps, ho=ho, wo=wo,
                             relu=relu, has_res=has_res)
    cost = pl.CostEstimate(
        flops=int(2 * m_total * kdim * cout),
        transcendentals=0,
        bytes_accessed=int(planes.size * 2 + w.size * 2
                           + m_total * cout * 2 * (2 if has_res else 1)))
    return pl.pallas_call(
        kern,
        out_shape=jax.ShapeDtypeStruct((m_total, cout), jnp.bfloat16),
        grid_spec=pltpu.PrefetchScalarGridSpec(
            num_scalar_prefetch=0,
            grid=(n // nb,),
            in_specs=in_specs,
            out_specs=pl.BlockSpec((mblk, cout), lambda i: (i, 0))),
        compiler_params=_cparams(1),
        cost_estimate=cost,
    )(*args)


# --------------------------------------------------------------------------
# Row-blocked fused matmul (BN shift / residual / ReLU epilogue) for the tiny
# cases: Cin=3 stem and 4x4-spatial layer4 (wrapper-built bf16 patches).
# --------------------------------------------------------------------------
def _rows_mm_kernel(a_ref, w_ref, b_ref, *rest, relu, has_res):
    if has_res:
        res_ref, o_ref = rest
    else:
        (o_ref,) = rest
    y = jnp.dot(a_ref[...], w_ref[...], preferred_element_type=jnp.float32)
    y = y + b_ref[...]
    if has_res:
        y = y + res_ref[...].astype(jnp.float32)
    if relu:
        y = jnp.maximum(y, 0.0)
    o_ref[...] = y.astype(o_ref.dtype)


def _pick_bm(m, k, budget=4 << 20):
    # Largest row block that divides m (8-aligned or full) whose double-
    # buffered bf16 block fits the budget -- K-aware, no unbounded fallback.
    cands = {m} if m <= 1024 else set()
    cands.update(d for d in range(8, min(m, 1024) + 1, 8) if m % d == 0)
    cands = sorted(cands)
    fits = [d for d in cands if 2 * d * k * 2 <= budget]
    return fits[-1] if fits else cands[0]


def _rows_mm(a, w, shift, *, relu, residual=None):
    m, k = a.shape
    cout = w.shape[-1]
    bm = _pick_bm(m, k)
    b2 = shift.reshape(1, cout)
    has_res = residual is not None

    in_specs = [
        pl.BlockSpec((bm, k), lambda i: (i, 0)),
        pl.BlockSpec((k, cout), lambda i: (0, 0)),
        pl.BlockSpec((1, cout), lambda i: (0, 0)),
    ]
    args = [a, w, b2]
    if has_res:
        in_specs.append(pl.BlockSpec((bm, cout), lambda i: (i, 0)))
        args.append(residual)

    kern = functools.partial(_rows_mm_kernel, relu=relu, has_res=has_res)
    cost = pl.CostEstimate(
        flops=int(2 * m * k * cout),
        transcendentals=0,
        bytes_accessed=int(a.size * 2 + w.size * 2
                           + m * cout * 2 * (2 if has_res else 1)))
    return pl.pallas_call(
        kern,
        out_shape=jax.ShapeDtypeStruct((m, cout), jnp.bfloat16),
        grid_spec=pltpu.PrefetchScalarGridSpec(
            num_scalar_prefetch=0,
            grid=(m // bm,),
            in_specs=in_specs,
            out_specs=pl.BlockSpec((bm, cout), lambda i: (i, 0))),
        compiler_params=_cparams(1),
        cost_estimate=cost,
    )(*args)


def _im2col_3x3(x, stride):
    n, h, w, c = x.shape
    ho, wo = h // stride, w // stride
    xp = jnp.pad(x, ((0, 0), (1, 1), (1, 1), (0, 0)))
    cols = [xp[:, dy:dy + stride * (ho - 1) + 1:stride,
               dx:dx + stride * (wo - 1) + 1:stride, :]
            for dy in range(3) for dx in range(3)]
    return jnp.concatenate(cols, axis=-1).reshape(n * ho * wo, 9 * c)


def conv_bn_act(x, w, shift, *, stride, relu, residual=None, batch_block=1):
    """conv (1x1 / 3x3 pad=1) + folded-BN shift + optional residual + ReLU.

    x: (N, H, W, Cin) bf16.  w: (T*Cin, Cout) bf16, rows tap-major
    (t = 3*dy + dx, Cin fastest), BN scale pre-folded.  residual (optional):
    (N*Ho*Wo, Cout) bf16.  Returns (N, Ho, Wo, Cout) bf16.
    """
    n, h, wsp, cin = x.shape
    kdim, cout = w.shape
    tcount = kdim // cin
    ho, wo = h // stride, wsp // stride

    if wo % 8 == 0 and cin % 64 == 0:
        y = _conv_bigk(x, w, shift, stride=stride, relu=relu,
                       residual=residual, batch_block=batch_block)
    else:
        if tcount == 9:
            patches = _im2col_3x3(x, stride)
        else:
            patches = x[:, ::stride, ::stride, :].reshape(n * ho * wo, cin)
        y = _rows_mm(patches, w, shift, relu=relu, residual=residual)
    return y.reshape(n, ho, wo, cout)


# --------------------------------------------------------------------------
# Fused SRM stage: separable high-pass / low-pass split + GAP(|HF|) + learned
# 64->64 mask matmul + sigmoid + HF*mask + LF recombine -- one kernel.
# --------------------------------------------------------------------------
def _srm_recal_kernel(xp_ref, mw_ref, mb_ref, o_ref):
    nb, hp, wp, c = xp_ref.shape
    h, w = hp - 2, wp - 2
    xp = xp_ref[...].astype(jnp.float32)
    # SRM high-pass = -0.25 * outer([1,-2,1], [1,-2,1])  (separable form).
    t = xp[:, 0:h, :, :] - 2.0 * xp[:, 1:h + 1, :, :] + xp[:, 2:h + 2, :, :]
    hf = -0.25 * (t[:, :, 0:w, :] - 2.0 * t[:, :, 1:w + 1, :]
                  + t[:, :, 2:w + 2, :])
    lf = xp[:, 1:h + 1, 1:w + 1, :] - hf
    gap = jnp.mean(jnp.abs(hf), axis=(1, 2))                       # (nb, C)
    logits = jnp.dot(gap, mw_ref[...],
                     preferred_element_type=jnp.float32) + mb_ref[...]
    mask = jax.nn.sigmoid(logits)                                  # (nb, C)
    o_ref[...] = (hf * mask.reshape(nb, 1, 1, c) + lf).astype(o_ref.dtype)


def srm_recalibrate(out4, mask_w, mask_b, batch_block):
    n, h, w, c = out4.shape
    xp = jnp.pad(out4, ((0, 0), (1, 1), (1, 1), (0, 0)))
    nb = batch_block
    return pl.pallas_call(
        _srm_recal_kernel,
        out_shape=jax.ShapeDtypeStruct((n, h, w, c), jnp.bfloat16),
        grid_spec=pltpu.PrefetchScalarGridSpec(
            num_scalar_prefetch=0,
            grid=(n // nb,),
            in_specs=[pl.BlockSpec((nb, h + 2, w + 2, c),
                                   lambda i: (i, 0, 0, 0)),
                      pl.BlockSpec((c, c), lambda i: (0, 0)),
                      pl.BlockSpec((1, c), lambda i: (0, 0))],
            out_specs=pl.BlockSpec((nb, h, w, c), lambda i: (i, 0, 0, 0))),
        compiler_params=_cparams(1),
    )(xp, mask_w, mask_b.reshape(1, c))


# --------------------------------------------------------------------------
# Fused 4x4 global average pool + final linear + bias (whole batch, one call).
# --------------------------------------------------------------------------
def _pool_linear_kernel(x_ref, w_ref, b_ref, o_ref):
    feat = jnp.mean(x_ref[...].astype(jnp.float32), axis=1)        # (N, C)
    o_ref[...] = jnp.dot(feat, w_ref[...],
                         preferred_element_type=jnp.float32) + b_ref[...]


def avgpool_linear(x3, w, b):
    n, _, _ = x3.shape
    ncls = w.shape[-1]
    return pl.pallas_call(
        _pool_linear_kernel,
        out_shape=jax.ShapeDtypeStruct((n, ncls), jnp.float32),
    )(x3, w, b.reshape(1, ncls))


# --------------------------------------------------------------------------
# Parameter init (deterministic, synthetic) and forward pass.
# --------------------------------------------------------------------------
def init_params(key, num_blocks=(1, 1, 1, 1), num_classes=10):
    keys = iter(jax.random.split(key, 64))

    def conv_w(k, cin, cout):
        # (k*k*Cin, Cout) with rows tap-major (t = dy*3 + dx), Cin fastest --
        # matches both the in-kernel window concat and the wrapper im2col
        # column order.  BatchNorm (inference, default init) scale is folded
        # into the bf16 weight; the shift stays f32.
        std = (2.0 / (k * k * cin)) ** 0.5
        w = jax.random.normal(next(keys), (k * k * cin, cout),
                              jnp.float32) * std
        eps = 1e-5
        gamma = jnp.ones((cout,), jnp.float32)
        beta = jnp.zeros((cout,), jnp.float32)
        mean = jnp.zeros((cout,), jnp.float32)
        var = jnp.ones((cout,), jnp.float32)
        scale = gamma / jnp.sqrt(var + eps)
        shift = beta - mean * scale
        return (w * scale[None, :]).astype(jnp.bfloat16), shift

    params = {}
    params["conv1_w"], params["conv1_b"] = conv_w(3, 3, 64)

    in_planes = 64
    layers = []
    for planes, nbl, stride0 in zip((64, 128, 256, 512), num_blocks,
                                    (1, 2, 2, 2)):
        blocks = []
        for s in [stride0] + [1] * (nbl - 1):
            blk = {"stride": s}
            blk["conv1_w"], blk["conv1_b"] = conv_w(3, in_planes, planes)
            blk["conv2_w"], blk["conv2_b"] = conv_w(3, planes, planes)
            if s != 1 or in_planes != planes:
                blk["sc_w"], blk["sc_b"] = conv_w(1, in_planes, planes)
            blocks.append(blk)
            in_planes = planes
        layers.append(blocks)
    params["layers"] = layers

    # SRMFilter / Recalibration learned channel mask (recon_size = 64).
    params["mask_w"] = (jax.random.normal(next(keys), (64, 64), jnp.float32)
                        * (1.0 / 64 ** 0.5))
    params["mask_b"] = jnp.zeros((64,), jnp.float32)
    # Final classifier linear(512 -> num_classes).
    params["linear_w"] = (jax.random.normal(next(keys), (512, num_classes),
                                            jnp.float32) * (1.0 / 512 ** 0.5))
    params["linear_b"] = jnp.zeros((num_classes,), jnp.float32)
    return params


def basic_block(x, blk, nb):
    s = blk["stride"]
    n, h, w, _ = x.shape
    ho, wo = h // s, w // s
    cout = blk["conv2_w"].shape[-1]

    h1 = conv_bn_act(x, blk["conv1_w"], blk["conv1_b"], stride=s, relu=True,
                     batch_block=nb)
    if "sc_w" in blk:
        sc = conv_bn_act(x, blk["sc_w"], blk["sc_b"], stride=s, relu=False,
                         batch_block=nb)
    else:
        sc = x
    res2 = sc.reshape(n * ho * wo, cout)
    # conv2: BN shift + residual add + ReLU fused into its matmul epilogue.
    return conv_bn_act(h1, blk["conv2_w"], blk["conv2_b"], stride=1, relu=True,
                       residual=res2, batch_block=nb)


def resnet_f_forward(params, x_nchw):
    # norm=False path (default ctor args): no input Normalization.
    x = jnp.transpose(x_nchw, (0, 2, 3, 1)).astype(jnp.bfloat16)  # NCHW->NHWC
    n = x.shape[0]
    nb = _batch_block(n)

    # out = relu(bn1(conv1(x)))
    out = conv_bn_act(x, params["conv1_w"], params["conv1_b"], stride=1,
                      relu=True, batch_block=nb)

    # HF, LF, mask = Filter(out); HF_fine = Recon(HF, mask); out = HF_fine + LF
    out = srm_recalibrate(out, params["mask_w"], params["mask_b"], nb)

    # layer1..layer4
    for blocks in params["layers"]:
        for blk in blocks:
            out = basic_block(out, blk, nb)

    # avg_pool2d(out, 4) + view + linear, fused into one whole-batch kernel.
    nimg, ho, wo, c = out.shape
    return avgpool_linear(out.reshape(nimg, ho * wo, c),
                          params["linear_w"], params["linear_b"])


if __name__ == "__main__":
    key = jax.random.PRNGKey(0)
    pkey, xkey = jax.random.split(key)
    # CIFAR-style 32x32 input so the final 4x4 avg pool + view -> (N, 512)
    # matches the module's linear layer (BasicBlock config, expansion=1).
    params = init_params(pkey, num_blocks=(1, 1, 1, 1), num_classes=10)
    x = jax.random.normal(xkey, (2, 3, 32, 32), jnp.float32)  # NCHW, like PyTorch
    logits = resnet_f_forward(params, x)
    logits = jax.block_until_ready(logits)
    assert logits.shape == (2, 10), logits.shape
    assert bool(jnp.all(jnp.isfinite(logits)))
    print("KERNEL_OK")
</pallas_src>

<mosaic_0001>
module attributes {stable_mosaic.version = 11 : i64} {
  func.func @_rows_mm_kernel(%arg0: i32, %arg1: memref<1024x27xbf16, #tpu.memory_space<vmem>>, %arg2: memref<27x64xbf16, #tpu.memory_space<vmem>>, %arg3: memref<1x64xf32, #tpu.memory_space<vmem>>, %arg4: memref<1024x64xbf16, #tpu.memory_space<vmem>>) attributes {dimension_semantics = [#tpu.dimension_semantics<parallel>], iteration_bounds = array<i64: 2>, scalar_prefetch = 0 : i64, scratch_operands = 0 : i64, tpu.core_type = #tpu.core_type<tc>, window_params = [{transform_indices = @transform_0, window_bounds = array<i64: 1024, 27>}, {pipeline_mode = #tpu.pipeline_mode<synchronous>, transform_indices = @transform_1, window_bounds = array<i64: 27, 64>}, {pipeline_mode = #tpu.pipeline_mode<synchronous>, transform_indices = @transform_2, window_bounds = array<i64: 1, 64>}, {transform_indices = @transform_3, window_bounds = array<i64: 1024, 64>}]} {
    %c0 = arith.constant 0 : index
    %c0_0 = arith.constant 0 : index
    %0 = vector.load %arg1[%c0, %c0_0] : memref<1024x27xbf16, #tpu.memory_space<vmem>>, vector<1024x27xbf16>
    %c0_1 = arith.constant 0 : index
    %c0_2 = arith.constant 0 : index
    %1 = vector.load %arg2[%c0_1, %c0_2] : memref<27x64xbf16, #tpu.memory_space<vmem>>, vector<27x64xbf16>
    %cst = arith.constant dense<0.000000e+00> : vector<1024x64xf32>
    %2 = tpu.matmul %0, %1, %cst {dimension_numbers = #tpu.dot_dimension_numbers<[1], [0], [0], [1], [0, 0, 1, 1], [], []>} : vector<1024x27xbf16>, vector<27x64xbf16>, vector<1024x64xf32> -> vector<1024x64xf32>
    %c0_3 = arith.constant 0 : index
    %c0_4 = arith.constant 0 : index
    %3 = vector.load %arg3[%c0_3, %c0_4] : memref<1x64xf32, #tpu.memory_space<vmem>>, vector<1x64xf32>
    %4 = vector.broadcast %3 : vector<1x64xf32> to vector<1024x64xf32>
    %5 = arith.addf %2, %4 : vector<1024x64xf32>
    %cst_5 = arith.constant 0.000000e+00 : f32
    %6 = vector.broadcast %cst_5 : f32 to vector<1024x64xf32>
    %7 = arith.maximumf %5, %6 : vector<1024x64xf32>
    %8 = arith.truncf %7 : vector<1024x64xf32> to vector<1024x64xbf16>
    %c0_6 = arith.constant 0 : index
    %c0_7 = arith.constant 0 : index
    %9 = vector.load %arg4[%c0_6, %c0_7] : memref<1024x64xbf16, #tpu.memory_space<vmem>>, vector<1024x64xbf16>
    tpu.vector_store %arg4[%c0_6, %c0_7], %8 {strides = array<i32>} : memref<1024x64xbf16, #tpu.memory_space<vmem>>, vector<1024x64xbf16>,
    return
  }
  func.func @transform_0(%arg0: i32) -> (i32, i32) {
    %c0_i32 = arith.constant 0 : i32
    %c0_i32_0 = arith.constant 0 : i32
    return %arg0, %c0_i32 : i32, i32
  }
  func.func @transform_1(%arg0: i32) -> (i32, i32) {
    %c0_i32 = arith.constant 0 : i32
    %c0_i32_0 = arith.constant 0 : i32
    %c0_i32_1 = arith.constant 0 : i32
    return %c0_i32, %c0_i32_0 : i32, i32
  }
  func.func @transform_2(%arg0: i32) -> (i32, i32) {
    %c0_i32 = arith.constant 0 : i32
    %c0_i32_0 = arith.constant 0 : i32
    %c0_i32_1 = arith.constant 0 : i32
    return %c0_i32, %c0_i32_0 : i32, i32
  }
  func.func @transform_3(%arg0: i32) -> (i32, i32) {
    %c0_i32 = arith.constant 0 : i32
    %c0_i32_0 = arith.constant 0 : i32
    return %arg0, %c0_i32 : i32, i32
  }
}

</mosaic_0001>

<llo_original>
// kernel: tpu_custom_call.1
$region0: #{tpu_custom_call.1}
  #allocation0 [shape = 'u32[]', space=smem, size = 0x4, offset = 0x4, fixed_abs, tag = 'smem constant byte address 0x4 - core index']
  #allocation1 [shape = 'u32[72,128]{1,0:T(1,128)}', space=vmem, size = 0x9000, scoped, tag = 'internal scratch']
  %s0 = inlined_call_operand.vmem [shape: bf16[2048,27], index: 0, kind: input, shape index: {}]
  %s1 = inlined_call_operand.vmem [shape: bf16[27,64], index: 1, kind: input, shape index: {}]
  %s2 = inlined_call_operand.vmem [shape: f32[1,64], index: 2, kind: input, shape index: {}]
  %s3 = inlined_call_operand.vmem [shape: bf16[2048,64], index: 3, kind: output, shape index: {}]
  %s4 = sld [smem:[#allocation0]]
  $region45: #{tpu_custom_call.1} parent=0
    _
  %s6 = ssub.s32 1, %s4
  %s7 = scalar_select 0, %s6, %s4
  loop: start=0, step=1, limit=4
  $region2: #{tpu_custom_call.1} parent=0 // loop_pre_header
    _
  $region3: #{tpu_custom_call.1} parent=0 // loop_header
    %s9 = sphi 0, %s13
    %p10 = scmp.ge.s32.totalorder %s9, 4
    %s19 = sphi 0, %s21
    %s22 = sphi 0, %s19
    %s23 = sphi 0, %s22
    %s39 = sphi 0, %s23
    %s43 = sphi 0, %s43
    %s45 = sphi 0, %s43
    %s46 = sphi 0, %s45
    %s60 = sphi 0, %s46
    %s64 = sphi 0, %s64
    %s66 = sphi 0, %s64
    %s67 = sphi 0, %s66
    %s81 = sphi 0, %s67
    %s87 = sphi 0, %s89
    %s90 = sphi 0, %s87
    %s91 = sphi 0, %s90
    %s107 = sphi 0, %s91
  $region4: #{tpu_custom_call.1} parent=0 // loop_header_branch
    %12 = sbr.rel (%p10) target = $region8
  $region5: #{tpu_custom_call.1} parent=0 // loop_body
    %s14 = ssub.s32 %s9, 1
    %s15 = ssub.s32 %s9, 2
    %s16 = sadd.s32 %s9, 1
    %s17 = ssub.s32 %s9, %s16
    %p18 = scmp.eq.s32.totalorder %s17, 0
    %s20 = sadd.s32 %s19, 1
    %s21 = scalar_select %p18, %s19, %s20
    %p24 = pneg %p18
    %p25 = scmp.eq.s32.totalorder %s9, 1
    %p26 = por %p24, %p25
    %p27 = scmp.ne.s32.totalorder %s19, %s22
    %p28 = scmp.eq.s32.totalorder %s9, 0
    %p29 = por %p27, %p28
    %p30 = scmp.ne.s32.totalorder %s19, %s22
    %p31 = scmp.eq.s32.totalorder %s14, 1
    %p32 = por %p30, %p31
    %p33 = scmp.ne.s32.totalorder %s22, %s23
    %p34 = scmp.eq.s32.totalorder %s14, 0
    %p35 = por %p33, %p34
    %p36 = scmp.ne.s32.totalorder %s22, %s23
    %p37 = scmp.eq.s32.totalorder %s15, 1
    %p38 = por %p36, %p37
    %p40 = scmp.ne.s32.totalorder %s23, %s39
    %p41 = scmp.eq.s32.totalorder %s15, 0
    %p42 = por %p40, %p41
    %s44 = sadd.s32 %s43, 1
    %p47 = scmp.eq.s32.totalorder %s9, 1
    %p48 = scmp.ne.s32.totalorder %s43, %s45
    %p49 = scmp.eq.s32.totalorder %s9, 0
    %p50 = por %p48, %p49
    %p51 = scmp.ne.s32.totalorder %s43, %s45
    %p52 = scmp.eq.s32.totalorder %s14, 1
    %p53 = por %p51, %p52
    %p54 = scmp.ne.s32.totalorder %s45, %s46
    %p55 = scmp.eq.s32.totalorder %s14, 0
    %p56 = por %p54, %p55
    %p57 = scmp.ne.s32.totalorder %s45, %s46
    %p58 = scmp.eq.s32.totalorder %s15, 1
    %p59 = por %p57, %p58
    %p61 = scmp.ne.s32.totalorder %s46, %s60
    %p62 = scmp.eq.s32.totalorder %s15, 0
    %p63 = por %p61, %p62
    %s65 = sadd.s32 %s64, 1
    %p68 = scmp.eq.s32.totalorder %s9, 1
    %p69 = scmp.ne.s32.totalorder %s64, %s66
    %p70 = scmp.eq.s32.totalorder %s9, 0
    %p71 = por %p69, %p70
    %p72 = scmp.ne.s32.totalorder %s64, %s66
    %p73 = scmp.eq.s32.totalorder %s14, 1
    %p74 = por %p72, %p73
    %p75 = scmp.ne.s32.totalorder %s66, %s67
    %p76 = scmp.eq.s32.totalorder %s14, 0
    %p77 = por %p75, %p76
    %p78 = scmp.ne.s32.totalorder %s66, %s67
    %p79 = scmp.eq.s32.totalorder %s15, 1
    %p80 = por %p78, %p79
    %p82 = scmp.ne.s32.totalorder %s67, %s81
    %p83 = scmp.eq.s32.totalorder %s15, 0
    %p84 = por %p82, %p83
    %s85 = ssub.s32 %s9, %s16
    %p86 = scmp.eq.s32.totalorder %s85, 0
    %s88 = sadd.s32 %s87, 1
    %s89 = scalar_select %p86, %s87, %s88
    %p92 = pneg %p86
    %p93 = scmp.eq.s32.totalorder %s9, 1
    %p94 = por %p92, %p93
    %p95 = scmp.ne.s32.totalorder %s87, %s90
    %p96 = scmp.eq.s32.totalorder %s9, 0
    %p97 = por %p95, %p96
    %p98 = scmp.ne.s32.totalorder %s87, %s90
    %p99 = scmp.eq.s32.totalorder %s14, 1
    %p100 = por %p98, %p99
    %p101 = scmp.ne.s32.totalorder %s90, %s91
    %p102 = scmp.eq.s32.totalorder %s14, 0
    %p103 = por %p101, %p102
    %p104 = scmp.ne.s32.totalorder %s90, %s91
    %p105 = scmp.eq.s32.totalorder %s15, 1
    %p106 = por %p104, %p105
    %p108 = scmp.ne.s32.totalorder %s91, %s107
    %p109 = scmp.eq.s32.totalorder %s15, 0
    %p110 = por %p108, %p109
    %p111 = scmp.le.s32.totalorder 1, %s9
    %p112 = scmp.lt.s32.totalorder %s9, 3
    %p113 = pnand %p111, %p112
    %p114 = pneg %p113
    // Predicated region
    $region9: #{tpu_custom_call.1} parent=5 // pred_check
      _
    $region10: #{tpu_custom_call.1} parent=5 // pred_check_branch
      %116 = sbr.rel (%p113) target = $region12
    $region11: #{tpu_custom_call.1} parent=5 // pred_region
      %s117 = ssub.s32 %s9, 1
      // Predicated region
      $region13: #{tpu_custom_call.1} parent=11 // pred_check
        %p118 = pneg %p56
      $region14: #{tpu_custom_call.1} parent=11 // pred_check_branch
        %120 = sbr.rel (%p118) target = $region16
      $region15: #{tpu_custom_call.1} parent=11 // pred_region
        _
      $region16: #{tpu_custom_call.1} parent=11 // pred_fallthru
        _
      // Predicated region
      $region17: #{tpu_custom_call.1} parent=11 // pred_check
        %p121 = pneg %p77
      $region18: #{tpu_custom_call.1} parent=11 // pred_check_branch
        %123 = sbr.rel (%p121) target = $region20
      $region19: #{tpu_custom_call.1} parent=11 // pred_region
        _
      $region20: #{tpu_custom_call.1} parent=11 // pred_fallthru
        _
    $region12: #{tpu_custom_call.1} parent=5 // pred_fallthru
      _
    %p124 = scmp.lt.s32.totalorder %s9, 2
    // Predicated region
    $region21: #{tpu_custom_call.1} parent=5 // pred_check
      %p125 = pneg %p124
    $region22: #{tpu_custom_call.1} parent=5 // pred_check_branch
      %127 = sbr.rel (%p125) target = $region24
    $region23: #{tpu_custom_call.1} parent=5 // pred_region
      // Predicated region
      $region25: #{tpu_custom_call.1} parent=23 // pred_check
        %p128 = pneg %p29
      $region26: #{tpu_custom_call.1} parent=23 // pred_check_branch
        %130 = sbr.rel (%p128) target = $region28
      $region27: #{tpu_custom_call.1} parent=23 // pred_region
        %s131 = smul.u32 128, %s9
        %p132 = scmp.lt.s32.totalorder %s131, 255
        %s133 = scalar_select %p132, %s131, 255
        %s134 = smul.addr %s133, 4
        %s135 = scalar_lea.vmem %s0, %s134
        %s136 = smul.u32 128, %s9
      $region28: #{tpu_custom_call.1} parent=23 // pred_fallthru
        _
    $region24: #{tpu_custom_call.1} parent=5 // pred_fallthru
      _
    %p137 = scmp.le.s32.totalorder 1, %s9
    %p138 = scmp.lt.s32.totalorder %s9, 3
    %p139 = pnand %p137, %p138
    %p140 = pneg %p139
    // Predicated region
    $region29: #{tpu_custom_call.1} parent=5 // pred_check
      _
    $region30: #{tpu_custom_call.1} parent=5 // pred_check_branch
      %142 = sbr.rel (%p139) target = $region32
    $region31: #{tpu_custom_call.1} parent=5 // pred_region
      %s143 = ssub.s32 %s9, 1
      %s144 = smul.u32 128, %s14
      %p145 = scmp.lt.s32.totalorder %s144, 255
      %s146 = scalar_select %p145, %s144, 255
      %s147 = smul.addr %s146, 4
      %s148 = scalar_lea.vmem %s0, %s147
      %p149 = pneg %p35
      %p150 = pneg %p32
      %p151 = pneg %p56
      %p152 = pneg %p53
      %p153 = pneg %p77
      %p154 = pneg %p74
      %p155 = pneg %p103
      %p156 = pneg %p100
      %s157 = smul.u32 128, %s14
      %p158 = scmp.lt.s32.totalorder %s157, 255
      %s159 = scalar_select %p158, %s157, 255
      %s160 = smul.addr %s159, 4
      %s161 = scalar_lea.vmem %s3, %s160
      %s162 = smul.u32 128, %s14
      %p163 = scmp.lt.s32.totalorder %s162, 255
      %s164 = scalar_select %p163, %s162, 255
      %s165 = smul.addr %s164, 4
      %s166 = scalar_lea.vmem %s0, %s165
      %s167 = smul.u32 128, %s14
      %s168 = smul.u32 128, %s14
      %p169 = scmp.lt.s32.totalorder %s168, 255
      %s170 = scalar_select %p169, %s168, 255
      %s171 = smul.addr %s170, 4
      %s172 = scalar_lea.vmem %s3, %s171
      %s173 = smul.u32 128, %s14
      %v175 = vld [vmem:[%s166] sm:$0xf]
      %v176 = vld [vmem:[%s166 + $0x4] sm:$0xf]
      %v177 = vld [vmem:[%s166 + $0x8] sm:$0xf]
      %v178 = vld [vmem:[%s166 + $0xc] sm:$0xf]
      %v179 = vld [vmem:[%s166 + $0x10] sm:$0xf]
      %v180 = vld [vmem:[%s166 + $0x14] sm:$0xf]
      %v181 = vld [vmem:[%s166 + $0x18] sm:$0xf]
      %v182 = vld [vmem:[%s166 + $0x1c] sm:$0xf]
      %v183 = vld [vmem:[%s166 + $0x20] sm:$0xf]
      %v184 = vld [vmem:[%s166 + $0x24] sm:$0xf]
      %v185 = vld [vmem:[%s166 + $0x28] sm:$0xf]
      %v186 = vld [vmem:[%s166 + $0x2c] sm:$0xf]
      %v187 = vld [vmem:[%s166 + $0x30] sm:$0xf]
      %v188 = vld [vmem:[%s166 + $0x34] sm:$0xf]
      %v189 = vld [vmem:[%s166 + $0x38] sm:$0xf]
      %v190 = vld [vmem:[%s166 + $0x3c] sm:$0xf]
      %v191 = vld [vmem:[%s166 + $0x40] sm:$0xf]
      %v192 = vld [vmem:[%s166 + $0x44] sm:$0xf]
      %v193 = vld [vmem:[%s166 + $0x48] sm:$0xf]
      %v194 = vld [vmem:[%s166 + $0x4c] sm:$0xf]
      %v195 = vld [vmem:[%s166 + $0x50] sm:$0xf]
      %v196 = vld [vmem:[%s166 + $0x54] sm:$0xf]
      %v197 = vld [vmem:[%s166 + $0x58] sm:$0xf]
      %v198 = vld [vmem:[%s166 + $0x5c] sm:$0xf]
      %v199 = vld [vmem:[%s166 + $0x60] sm:$0xf]
      %v200 = vld [vmem:[%s166 + $0x64] sm:$0xf]
      %v201 = vld [vmem:[%s166 + $0x68] sm:$0xf]
      %v202 = vld [vmem:[%s166 + $0x6c] sm:$0xf]
      %v203 = vld [vmem:[%s166 + $0x70] sm:$0xf]
      %v204 = vld [vmem:[%s166 + $0x74] sm:$0xf]
      %v205 = vld [vmem:[%s166 + $0x78] sm:$0xf]
      %v206 = vld [vmem:[%s166 + $0x7c] sm:$0xf]
      %v207 = vld [vmem:[%s166 + $0x80] sm:$0xf]
      %v208 = vld [vmem:[%s166 + $0x84] sm:$0xf]
      %v209 = vld [vmem:[%s166 + $0x88] sm:$0xf]
      %v210 = vld [vmem:[%s166 + $0x8c] sm:$0xf]
      %v211 = vld [vmem:[%s166 + $0x90] sm:$0xf]
      %v212 = vld [vmem:[%s166 + $0x94] sm:$0xf]
      %v213 = vld [vmem:[%s166 + $0x98] sm:$0xf]
      %v214 = vld [vmem:[%s166 + $0x9c] sm:$0xf]
      %v215 = vld [vmem:[%s166 + $0xa0] sm:$0xf]
      %v216 = vld [vmem:[%s166 + $0xa4] sm:$0xf]
      %v217 = vld [vmem:[%s166 + $0xa8] sm:$0xf]
      %v218 = vld [vmem:[%s166 + $0xac] sm:$0xf]
      %v219 = vld [vmem:[%s166 + $0xb0] sm:$0xf]
      %v220 = vld [vmem:[%s166 + $0xb4] sm:$0xf]
      %v221 = vld [vmem:[%s166 + $0xb8] sm:$0xf]
      %v222 = vld [vmem:[%s166 + $0xbc] sm:$0xf]
      %v223 = vld [vmem:[%s166 + $0xc0] sm:$0xf]
      %v224 = vld [vmem:[%s166 + $0xc4] sm:$0xf]
      %v225 = vld [vmem:[%s166 + $0xc8] sm:$0xf]
      %v226 = vld [vmem:[%s166 + $0xcc] sm:$0xf]
      %v227 = vld [vmem:[%s166 + $0xd0] sm:$0xf]
      %v228 = vld [vmem:[%s166 + $0xd4] sm:$0xf]
      %v229 = vld [vmem:[%s166 + $0xd8] sm:$0xf]
      %v230 = vld [vmem:[%s166 + $0xdc] sm:$0xf]
      %v231 = vld [vmem:[%s166 + $0xe0] sm:$0xf]
      %v232 = vld [vmem:[%s166 + $0xe4] sm:$0xf]
      %v233 = vld [vmem:[%s166 + $0xe8] sm:$0xf]
      %v234 = vld [vmem:[%s166 + $0xec] sm:$0xf]
      %v235 = vld [vmem:[%s166 + $0xf0] sm:$0xf]
      %v236 = vld [vmem:[%s166 + $0xf4] sm:$0xf]
      %v237 = vld [vmem:[%s166 + $0xf8] sm:$0xf]
      %v238 = vld [vmem:[%s166 + $0xfc] sm:$0xf]
      %v239 = vld [vmem:[%s166 + $0x100] sm:$0xf]
      %v240 = vld [vmem:[%s166 + $0x104] sm:$0xf]
      %v241 = vld [vmem:[%s166 + $0x108] sm:$0xf]
      %v242 = vld [vmem:[%s166 + $0x10c] sm:$0xf]
      %v243 = vld [vmem:[%s166 + $0x110] sm:$0xf]
      %v244 = vld [vmem:[%s166 + $0x114] sm:$0xf]
      %v245 = vld [vmem:[%s166 + $0x118] sm:$0xf]
      %v246 = vld [vmem:[%s166 + $0x11c] sm:$0xf]
      %v247 = vld [vmem:[%s166 + $0x120] sm:$0xf]
      %v248 = vld [vmem:[%s166 + $0x124] sm:$0xf]
      %v249 = vld [vmem:[%s166 + $0x128] sm:$0xf]
      %v250 = vld [vmem:[%s166 + $0x12c] sm:$0xf]
      %v251 = vld [vmem:[%s166 + $0x130] sm:$0xf]
      %v252 = vld [vmem:[%s166 + $0x134] sm:$0xf]
      %v253 = vld [vmem:[%s166 + $0x138] sm:$0xf]
      %v254 = vld [vmem:[%s166 + $0x13c] sm:$0xf]
      %v255 = vld [vmem:[%s166 + $0x140] sm:$0xf]
      %v256 = vld [vmem:[%s166 + $0x144] sm:$0xf]
      %v257 = vld [vmem:[%s166 + $0x148] sm:$0xf]
      %v258 = vld [vmem:[%s166 + $0x14c] sm:$0xf]
      %v259 = vld [vmem:[%s166 + $0x150] sm:$0xf]
      %v260 = vld [vmem:[%s166 + $0x154] sm:$0xf]
      %v261 = vld [vmem:[%s166 + $0x158] sm:$0xf]
      %v262 = vld [vmem:[%s166 + $0x15c] sm:$0xf]
      %v263 = vld [vmem:[%s166 + $0x160] sm:$0xf]
      %v264 = vld [vmem:[%s166 + $0x164] sm:$0xf]
      %v265 = vld [vmem:[%s166 + $0x168] sm:$0xf]
      %v266 = vld [vmem:[%s166 + $0x16c] sm:$0xf]
      %v267 = vld [vmem:[%s166 + $0x170] sm:$0xf]
      %v268 = vld [vmem:[%s166 + $0x174] sm:$0xf]
      %v269 = vld [vmem:[%s166 + $0x178] sm:$0xf]
      %v270 = vld [vmem:[%s166 + $0x17c] sm:$0xf]
      %v271 = vld [vmem:[%s166 + $0x180] sm:$0xf]
      %v272 = vld [vmem:[%s166 + $0x184] sm:$0xf]
      %v273 = vld [vmem:[%s166 + $0x188] sm:$0xf]
      %v274 = vld [vmem:[%s166 + $0x18c] sm:$0xf]
      %v275 = vld [vmem:[%s166 + $0x190] sm:$0xf]
      %v276 = vld [vmem:[%s166 + $0x194] sm:$0xf]
      %v277 = vld [vmem:[%s166 + $0x198] sm:$0xf]
      %v278 = vld [vmem:[%s166 + $0x19c] sm:$0xf]
      %v279 = vld [vmem:[%s166 + $0x1a0] sm:$0xf]
      %v280 = vld [vmem:[%s166 + $0x1a4] sm:$0xf]
      %v281 = vld [vmem:[%s166 + $0x1a8] sm:$0xf]
      %v282 = vld [vmem:[%s166 + $0x1ac] sm:$0xf]
      %v283 = vld [vmem:[%s166 + $0x1b0] sm:$0xf]
      %v284 = vld [vmem:[%s166 + $0x1b4] sm:$0xf]
      %v285 = vld [vmem:[%s166 + $0x1b8] sm:$0xf]
      %v286 = vld [vmem:[%s166 + $0x1bc] sm:$0xf]
      %v287 = vld [vmem:[%s166 + $0x1c0] sm:$0xf]
      %v288 = vld [vmem:[%s166 + $0x1c4] sm:$0xf]
      %v289 = vld [vmem:[%s166 + $0x1c8] sm:$0xf]
      %v290 = vld [vmem:[%s166 + $0x1cc] sm:$0xf]
      %v291 = vld [vmem:[%s166 + $0x1d0] sm:$0xf]
      %v292 = vld [vmem:[%s166 + $0x1d4] sm:$0xf]
      %v293 = vld [vmem:[%s166 + $0x1d8] sm:$0xf]
      %v294 = vld [vmem:[%s166 + $0x1dc] sm:$0xf]
      %v295 = vld [vmem:[%s166 + $0x1e0] sm:$0xf]
      %v296 = vld [vmem:[%s166 + $0x1e4] sm:$0xf]
      %v297 = vld [vmem:[%s166 + $0x1e8] sm:$0xf]
      %v298 = vld [vmem:[%s166 + $0x1ec] sm:$0xf]
      %v299 = vld [vmem:[%s166 + $0x1f0] sm:$0xf]
      %v300 = vld [vmem:[%s166 + $0x1f4] sm:$0xf]
      %v301 = vld [vmem:[%s166 + $0x1f8] sm:$0xf]
      %v302 = vld [vmem:[%s166 + $0x1fc] sm:$0xf]
      %v303 = vld [vmem:[%s1] sm:$0xf]
      %v304 = vld [vmem:[%s1 + $0x4] sm:$0xf]
      %v305 = vld [vmem:[%s1 + $0x8] sm:$0xf]
      %v306 = vld [vmem:[%s1 + $0xc] sm:$0x3]
      %v307 = vld [vmem:[%s2] sm:$0x1]
      %v309 = vperm.slane %v307, 0
      %v439 = vunpack.c.l.b16 %v175
      %v440 = vunpack.c.l.b16 %v176
      %v441 = vunpack.c.l.b16 %v177
      %v442 = vunpack.c.l.b16 %v178
      %v443 = vunpack.c.l.b16 %v179
      %v444 = vunpack.c.l.b16 %v180
      %v445 = vunpack.c.l.b16 %v181
      %v446 = vunpack.c.l.b16 %v182
      %v447 = vunpack.c.l.b16 %v183
      %v448 = vunpack.c.l.b16 %v184
      %v449 = vunpack.c.l.b16 %v185
      %v450 = vunpack.c.l.b16 %v186
      %v451 = vunpack.c.l.b16 %v187
      %v452 = vunpack.c.l.b16 %v188
      %v453 = vunpack.c.l.b16 %v189
      %v454 = vunpack.c.l.b16 %v190
      %v455 = vunpack.c.l.b16 %v191
      %v456 = vunpack.c.l.b16 %v192
      %v457 = vunpack.c.l.b16 %v193
      %v458 = vunpack.c.l.b16 %v194
      %v459 = vunpack.c.l.b16 %v195
      %v460 = vunpack.c.l.b16 %v196
      %v461 = vunpack.c.l.b16 %v197
      %v462 = vunpack.c.l.b16 %v198
      %v463 = vunpack.c.l.b16 %v199
      %v464 = vunpack.c.l.b16 %v200
      %v465 = vunpack.c.l.b16 %v201
      %v466 = vunpack.c.l.b16 %v202
      %v467 = vunpack.c.l.b16 %v203
      %v468 = vunpack.c.l.b16 %v204
      %v469 = vunpack.c.l.b16 %v205
      %v470 = vunpack.c.l.b16 %v206
      %v471 = vunpack.c.l.b16 %v207
      %v472 = vunpack.c.l.b16 %v208
      %v473 = vunpack.c.l.b16 %v209
      %v474 = vunpack.c.l.b16 %v210
      %v475 = vunpack.c.l.b16 %v211
      %v476 = vunpack.c.l.b16 %v212
      %v477 = vunpack.c.l.b16 %v213
      %v478 = vunpack.c.l.b16 %v214
      %v479 = vunpack.c.l.b16 %v215
      %v480 = vunpack.c.l.b16 %v216
      %v481 = vunpack.c.l.b16 %v217
      %v482 = vunpack.c.l.b16 %v218
      %v483 = vunpack.c.l.b16 %v219
      %v484 = vunpack.c.l.b16 %v220
      %v485 = vunpack.c.l.b16 %v221
      %v486 = vunpack.c.l.b16 %v222
      %v487 = vunpack.c.l.b16 %v223
      %v488 = vunpack.c.l.b16 %v224
      %v489 = vunpack.c.l.b16 %v225
      %v490 = vunpack.c.l.b16 %v226
      %v491 = vunpack.c.l.b16 %v227
      %v492 = vunpack.c.l.b16 %v228
      %v493 = vunpack.c.l.b16 %v229
      %v494 = vunpack.c.l.b16 %v230
      %v495 = vunpack.c.l.b16 %v231
      %v496 = vunpack.c.l.b16 %v232
      %v497 = vunpack.c.l.b16 %v233
      %v498 = vunpack.c.l.b16 %v234
      %v499 = vunpack.c.l.b16 %v235
      %v500 = vunpack.c.l.b16 %v236
      %v501 = vunpack.c.l.b16 %v237
      %v502 = vunpack.c.l.b16 %v238
      %v503 = vunpack.c.l.b16 %v239
      %v504 = vunpack.c.l.b16 %v240
      %v505 = vunpack.c.l.b16 %v241
      %v506 = vunpack.c.l.b16 %v242
      %v507 = vunpack.c.l.b16 %v243
      %v508 = vunpack.c.l.b16 %v244
      %v509 = vunpack.c.l.b16 %v245
      %v510 = vunpack.c.l.b16 %v246
      %v511 = vunpack.c.l.b16 %v247
      %v512 = vunpack.c.l.b16 %v248
      %v513 = vunpack.c.l.b16 %v249
      %v514 = vunpack.c.l.b16 %v250
      %v515 = vunpack.c.l.b16 %v251
      %v516 = vunpack.c.l.b16 %v252
      %v517 = vunpack.c.l.b16 %v253
      %v518 = vunpack.c.l.b16 %v254
      %v519 = vunpack.c.l.b16 %v255
      %v520 = vunpack.c.l.b16 %v256
      %v521 = vunpack.c.l.b16 %v257
      %v522 = vunpack.c.l.b16 %v258
      %v523 = vunpack.c.l.b16 %v259
      %v524 = vunpack.c.l.b16 %v260
      %v525 = vunpack.c.l.b16 %v261
      %v526 = vunpack.c.l.b16 %v262
      %v527 = vunpack.c.l.b16 %v263
      %v528 = vunpack.c.l.b16 %v264
      %v529 = vunpack.c.l.b16 %v265
      %v530 = vunpack.c.l.b16 %v266
      %v531 = vunpack.c.l.b16 %v267
      %v532 = vunpack.c.l.b16 %v268
      %v533 = vunpack.c.l.b16 %v269
      %v534 = vunpack.c.l.b16 %v270
      %v535 = vunpack.c.l.b16 %v271
      %v536 = vunpack.c.l.b16 %v272
      %v537 = vunpack.c.l.b16 %v273
      %v538 = vunpack.c.l.b16 %v274
      %v539 = vunpack.c.l.b16 %v275
      %v540 = vunpack.c.l.b16 %v276
      %v541 = vunpack.c.l.b16 %v277
      %v542 = vunpack.c.l.b16 %v278
      %v543 = vunpack.c.l.b16 %v279
      %v544 = vunpack.c.l.b16 %v280
      %v545 = vunpack.c.l.b16 %v281
      %v546 = vunpack.c.l.b16 %v282
      %v547 = vunpack.c.l.b16 %v283
      %v548 = vunpack.c.l.b16 %v284
      %v549 = vunpack.c.l.b16 %v285
      %v550 = vunpack.c.l.b16 %v286
      %v551 = vunpack.c.l.b16 %v287
      %v552 = vunpack.c.l.b16 %v288
      %v553 = vunpack.c.l.b16 %v289
      %v554 = vunpack.c.l.b16 %v290
      %v555 = vunpack.c.l.b16 %v291
      %v556 = vunpack.c.l.b16 %v292
      %v557 = vunpack.c.l.b16 %v293
      %v558 = vunpack.c.l.b16 %v294
      %v559 = vunpack.c.l.b16 %v295
      %v560 = vunpack.c.l.b16 %v296
      %v561 = vunpack.c.l.b16 %v297
      %v562 = vunpack.c.l.b16 %v298
      %v563 = vunpack.c.l.b16 %v299
      %v564 = vunpack.c.l.b16 %v300
      %v565 = vunpack.c.l.b16 %v301
      %v566 = vunpack.c.l.b16 %v302
      %v567 = vpack.c.b16 %v440, %v439
      %v568 = vpack.c.b16 %v442, %v441
      %v569 = vpack.c.b16 %v444, %v443
      %v570 = vpack.c.b16 %v446, %v445
      %v571 = vpack.c.b16 %v448, %v447
      %v572 = vpack.c.b16 %v450, %v449
      %v573 = vpack.c.b16 %v452, %v451
      %v574 = vpack.c.b16 %v454, %v453
      %v575 = vpack.c.b16 %v456, %v455
      %v576 = vpack.c.b16 %v458, %v457
      %v577 = vpack.c.b16 %v460, %v459
      %v578 = vpack.c.b16 %v462, %v461
      %v579 = vpack.c.b16 %v464, %v463
      %v580 = vpack.c.b16 %v466, %v465
      %v581 = vpack.c.b16 %v468, %v467
      %v582 = vpack.c.b16 %v470, %v469
      %v583 = vpack.c.b16 %v472, %v471
      %v584 = vpack.c.b16 %v474, %v473
      %v585 = vpack.c.b16 %v476, %v475
      %v586 = vpack.c.b16 %v478, %v477
      %v587 = vpack.c.b16 %v480, %v479
      %v588 = vpack.c.b16 %v482, %v481
      %v589 = vpack.c.b16 %v484, %v483
      %v590 = vpack.c.b16 %v486, %v485
      %v591 = vpack.c.b16 %v488, %v487
      %v592 = vpack.c.b16 %v490, %v489
      %v593 = vpack.c.b16 %v492, %v491
      %v594 = vpack.c.b16 %v494, %v493
      %v595 = vpack.c.b16 %v496, %v495
      %v596 = vpack.c.b16 %v498, %v497
      %v597 = vpack.c.b16 %v500, %v499
      %v598 = vpack.c.b16 %v502, %v501
      %v599 = vpack.c.b16 %v504, %v503
      %v600 = vpack.c.b16 %v506, %v505
      %v601 = vpack.c.b16 %v508, %v507
      %v602 = vpack.c.b16 %v510, %v509
      %v603 = vpack.c.b16 %v512, %v511
      %v604 = vpack.c.b16 %v514, %v513
      %v605 = vpack.c.b16 %v516, %v515
      %v606 = vpack.c.b16 %v518, %v517
      %v607 = vpack.c.b16 %v520, %v519
      %v608 = vpack.c.b16 %v522, %v521
      %v609 = vpack.c.b16 %v524, %v523
      %v610 = vpack.c.b16 %v526, %v525
      %v611 = vpack.c.b16 %v528, %v527
      %v612 = vpack.c.b16 %v530, %v529
      %v613 = vpack.c.b16 %v532, %v531
      %v614 = vpack.c.b16 %v534, %v533
      %v615 = vpack.c.b16 %v536, %v535
      %v616 = vpack.c.b16 %v538, %v537
      %v617 = vpack.c.b16 %v540, %v539
      %v618 = vpack.c.b16 %v542, %v541
      %v619 = vpack.c.b16 %v544, %v543
      %v620 = vpack.c.b16 %v546, %v545
      %v621 = vpack.c.b16 %v548, %v547
      %v622 = vpack.c.b16 %v550, %v549
      %v623 = vpack.c.b16 %v552, %v551
      %v624 = vpack.c.b16 %v554, %v553
      %v625 = vpack.c.b16 %v556, %v555
      %v626 = vpack.c.b16 %v558, %v557
      %v627 = vpack.c.b16 %v560, %v559
      %v628 = vpack.c.b16 %v562, %v561
      %v629 = vpack.c.b16 %v564, %v563
      %v630 = vpack.c.b16 %v566, %v565
      %v635 = vunpack.c.l.b16 %v303
      %v636 = vunpack.c.l.b16 %v304
      %v637 = vunpack.c.l.b16 %v305
      %v638 = vunpack.c.l.b16 %v306
      %v639 = vpack.c.b16 %v636, %v635
      %v640 = vpack.c.b16 %v638, %v637
      %vm642 = vcmask 220160
      %v644 = vsel %vm642, %v567, 0
      %v647 = vsel %vm642, %v568, 0
      %v650 = vsel %vm642, %v569, 0
      %v653 = vsel %vm642, %v570, 0
      %v656 = vsel %vm642, %v571, 0
      %v659 = vsel %vm642, %v572, 0
      %v662 = vsel %vm642, %v573, 0
      %v665 = vsel %vm642, %v574, 0
      %v668 = vsel %vm642, %v575, 0
      %v671 = vsel %vm642, %v576, 0
      %v674 = vsel %vm642, %v577, 0
      %v677 = vsel %vm642, %v578, 0
      %v680 = vsel %vm642, %v579, 0
      %v683 = vsel %vm642, %v580, 0
      %v686 = vsel %vm642, %v581, 0
      %v689 = vsel %vm642, %v582, 0
      %v692 = vsel %vm642, %v583, 0
      %v695 = vsel %vm642, %v584, 0
      %v698 = vsel %vm642, %v585, 0
      %v701 = vsel %vm642, %v586, 0
      %v704 = vsel %vm642, %v587, 0
      %v707 = vsel %vm642, %v588, 0
      %v710 = vsel %vm642, %v589, 0
      %v713 = vsel %vm642, %v590, 0
      %v716 = vsel %vm642, %v591, 0
      %v719 = vsel %vm642, %v592, 0
      %v722 = vsel %vm642, %v593, 0
      %v725 = vsel %vm642, %v594, 0
      %v728 = vsel %vm642, %v595, 0
      %v731 = vsel %vm642, %v596, 0
      %v734 = vsel %vm642, %v597, 0
      %v737 = vsel %vm642, %v598, 0
      %v740 = vsel %vm642, %v599, 0
      %v743 = vsel %vm642, %v600, 0
      %v746 = vsel %vm642, %v601, 0
      %v749 = vsel %vm642, %v602, 0
      %v752 = vsel %vm642, %v603, 0
      %v755 = vsel %vm642, %v604, 0
      %v758 = vsel %vm642, %v605, 0
      %v761 = vsel %vm642, %v606, 0
      %v764 = vsel %vm642, %v607, 0
      %v767 = vsel %vm642, %v608, 0
      %v770 = vsel %vm642, %v609, 0
      %v773 = vsel %vm642, %v610, 0
      %v776 = vsel %vm642, %v611, 0
      %v779 = vsel %vm642, %v612, 0
      %v782 = vsel %vm642, %v613, 0
      %v785 = vsel %vm642, %v614, 0
      %v788 = vsel %vm642, %v615, 0
      %v791 = vsel %vm642, %v616, 0
      %v794 = vsel %vm642, %v617, 0
      %v797 = vsel %vm642, %v618, 0
      %v800 = vsel %vm642, %v619, 0
      %v803 = vsel %vm642, %v620, 0
      %v806 = vsel %vm642, %v621, 0
      %v809 = vsel %vm642, %v622, 0
      %v812 = vsel %vm642, %v623, 0
      %v815 = vsel %vm642, %v624, 0
      %v818 = vsel %vm642, %v625, 0
      %v821 = vsel %vm642, %v626, 0
      %v824 = vsel %vm642, %v627, 0
      %v827 = vsel %vm642, %v628, 0
      %v830 = vsel %vm642, %v629, 0
      %v833 = vsel %vm642, %v630, 0
      %vm835 = vcmask 1044480
      %vm836 = vcmask 1045504
      %v837 = vsel %vm835, 4294967295, 65535
      %v838 = vsel %vm836, %v837, 0
      %v840 = vand.u32 %v640, %v838
      %842 = vmatpush.bf16.msra.mxu0 0
      %843 = vmatpush.bf16.msra.mxu0 0
      %844 = vmatpush.bf16.msra.mxu0 0
      %845 = vmatpush.bf16.msra.mxu0 0
      %846 = vmatpush.bf16.msra.mxu0 0
      %847 = vmatpush.bf16.msra.mxu0 0
      %848 = vmatpush.bf16.msra.mxu0 %v840
      %849 = vmatpush.bf16.msra.mxu0 %v639
      %850 = vmatmul.bf16.gmra.mxu0 %v644
      %v851 = vpop.f32.mrf.mxu0
      %v852 = vadd.f32 %v309, %v851
      %v853 = vpop.f32.mrf.mxu0
      %v854 = vadd.f32 %v309, %v853
      %855 = vmatmul.bf16.gmra.mxu0 %v647
      %v856 = vpop.f32.mrf.mxu0
      %v857 = vadd.f32 %v309, %v856
      %v858 = vpop.f32.mrf.mxu0
      %v859 = vadd.f32 %v309, %v858
      %860 = vmatmul.bf16.gmra.mxu0 %v650
      %v861 = vpop.f32.mrf.mxu0
      %v862 = vadd.f32 %v309, %v861
      %v863 = vpop.f32.mrf.mxu0
      %v864 = vadd.f32 %v309, %v863
      %865 = vmatmul.bf16.gmra.mxu0 %v653
      %v866 = vpop.f32.mrf.mxu0
      %v867 = vadd.f32 %v309, %v866
      %v868 = vpop.f32.mrf.mxu0
      %v869 = vadd.f32 %v309, %v868
      %870 = vmatmul.bf16.gmra.mxu0 %v656
      %v871 = vpop.f32.mrf.mxu0
      %v872 = vadd.f32 %v309, %v871
      %v873 = vpop.f32.mrf.mxu0
      %v874 = vadd.f32 %v309, %v873
      %875 = vmatmul.bf16.gmra.mxu0 %v659
      %v876 = vpop.f32.mrf.mxu0
      %v877 = vadd.f32 %v309, %v876
      %v878 = vpop.f32.mrf.mxu0
      %v879 = vadd.f32 %v309, %v878
      %880 = vmatmul.bf16.gmra.mxu0 %v662
      %v881 = vpop.f32.mrf.mxu0
      %v882 = vadd.f32 %v309, %v881
      %v883 = vpop.f32.mrf.mxu0
      %v884 = vadd.f32 %v309, %v883
      %885 = vmatmul.bf16.gmra.mxu0 %v665
      %v886 = vpop.f32.mrf.mxu0
      %v887 = vadd.f32 %v309, %v886
      %v888 = vpop.f32.mrf.mxu0
      %v889 = vadd.f32 %v309, %v888
      %890 = vmatmul.bf16.gmra.mxu0 %v668
      %v891 = vpop.f32.mrf.mxu0
      %v892 = vadd.f32 %v309, %v891
      %v893 = vpop.f32.mrf.mxu0
      %v894 = vadd.f32 %v309, %v893
      %895 = vmatmul.bf16.gmra.mxu0 %v671
      %v896 = vpop.f32.mrf.mxu0
      %v897 = vadd.f32 %v309, %v896
      %v898 = vpop.f32.mrf.mxu0
      %v899 = vadd.f32 %v309, %v898
      %900 = vmatmul.bf16.gmra.mxu0 %v674
      %v901 = vpop.f32.mrf.mxu0
      %v902 = vadd.f32 %v309, %v901
      %v903 = vpop.f32.mrf.mxu0
      %v904 = vadd.f32 %v309, %v903
      %905 = vmatmul.bf16.gmra.mxu0 %v677
      %v906 = vpop.f32.mrf.mxu0
      %v907 = vadd.f32 %v309, %v906
      %v908 = vpop.f32.mrf.mxu0
      %v909 = vadd.f32 %v309, %v908
      %910 = vmatmul.bf16.gmra.mxu0 %v680
      %v911 = vpop.f32.mrf.mxu0
      %v912 = vadd.f32 %v309, %v911
      %v913 = vpop.f32.mrf.mxu0
      %v914 = vadd.f32 %v309, %v913
      %915 = vmatmul.bf16.gmra.mxu0 %v683
      %v916 = vpop.f32.mrf.mxu0
      %v917 = vadd.f32 %v309, %v916
      %v918 = vpop.f32.mrf.mxu0
      %v919 = vadd.f32 %v309, %v918
      %920 = vmatmul.bf16.gmra.mxu0 %v686
      %v921 = vpop.f32.mrf.mxu0
      %v922 = vadd.f32 %v309, %v921
      %v923 = vpop.f32.mrf.mxu0
      %v924 = vadd.f32 %v309, %v923
      %925 = vmatmul.bf16.gmra.mxu0 %v689
      %v926 = vpop.f32.mrf.mxu0
      %v927 = vadd.f32 %v309, %v926
      %v928 = vpop.f32.mrf.mxu0
      %v929 = vadd.f32 %v309, %v928
      %930 = vmatmul.bf16.gmra.mxu0 %v692
      %v931 = vpop.f32.mrf.mxu0
      %v932 = vadd.f32 %v309, %v931
      %v933 = vpop.f32.mrf.mxu0
      %v934 = vadd.f32 %v309, %v933
      %935 = vmatmul.bf16.gmra.mxu0 %v695
      %v936 = vpop.f32.mrf.mxu0
      %v937 = vadd.f32 %v309, %v936
      %v938 = vpop.f32.mrf.mxu0
      %v939 = vadd.f32 %v309, %v938
      %940 = vmatmul.bf16.gmra.mxu0 %v698
      %v941 = vpop.f32.mrf.mxu0
      %v942 = vadd.f32 %v309, %v941
      %v943 = vpop.f32.mrf.mxu0
      %v944 = vadd.f32 %v309, %v943
      %945 = vmatmul.bf16.gmra.mxu0 %v701
      %v946 = vpop.f32.mrf.mxu0
      %v947 = vadd.f32 %v309, %v946
      %v948 = vpop.f32.mrf.mxu0
      %v949 = vadd.f32 %v309, %v948
      %950 = vmatmul.bf16.gmra.mxu0 %v704
      %v951 = vpop.f32.mrf.mxu0
      %v952 = vadd.f32 %v309, %v951
      %v953 = vpop.f32.mrf.mxu0
      %v954 = vadd.f32 %v309, %v953
      %955 = vmatmul.bf16.gmra.mxu0 %v707
      %v956 = vpop.f32.mrf.mxu0
      %v957 = vadd.f32 %v309, %v956
      %v958 = vpop.f32.mrf.mxu0
      %v959 = vadd.f32 %v309, %v958
      %960 = vmatmul.bf16.gmra.mxu0 %v710
      %v961 = vpop.f32.mrf.mxu0
      %v962 = vadd.f32 %v309, %v961
      %v963 = vpop.f32.mrf.mxu0
      %v964 = vadd.f32 %v309, %v963
      %965 = vmatmul.bf16.gmra.mxu0 %v713
      %v966 = vpop.f32.mrf.mxu0
      %v967 = vadd.f32 %v309, %v966
      %v968 = vpop.f32.mrf.mxu0
      %v969 = vadd.f32 %v309, %v968
      %970 = vmatmul.bf16.gmra.mxu0 %v716
      %v971 = vpop.f32.mrf.mxu0
      %v972 = vadd.f32 %v309, %v971
      %v973 = vpop.f32.mrf.mxu0
      %v974 = vadd.f32 %v309, %v973
      %975 = vmatmul.bf16.gmra.mxu0 %v719
      %v976 = vpop.f32.mrf.mxu0
      %v977 = vadd.f32 %v309, %v976
      %v978 = vpop.f32.mrf.mxu0
      %v979 = vadd.f32 %v309, %v978
      %980 = vmatmul.bf16.gmra.mxu0 %v722
      %v981 = vpop.f32.mrf.mxu0
      %v982 = vadd.f32 %v309, %v981
      %v983 = vpop.f32.mrf.mxu0
      %v984 = vadd.f32 %v309, %v983
      %985 = vmatmul.bf16.gmra.mxu0 %v725
      %v986 = vpop.f32.mrf.mxu0
      %v987 = vadd.f32 %v309, %v986
      %v988 = vpop.f32.mrf.mxu0
      %v989 = vadd.f32 %v309, %v988
      %990 = vmatmul.bf16.gmra.mxu0 %v728
      %v991 = vpop.f32.mrf.mxu0
      %v992 = vadd.f32 %v309, %v991
      %v993 = vpop.f32.mrf.mxu0
      %v994 = vadd.f32 %v309, %v993
      %995 = vmatmul.bf16.gmra.mxu0 %v731
      %v996 = vpop.f32.mrf.mxu0
      %v997 = vadd.f32 %v309, %v996
      %v998 = vpop.f32.mrf.mxu0
      %v999 = vadd.f32 %v309, %v998
      %1000 = vmatmul.bf16.gmra.mxu0 %v734
      %v1001 = vpop.f32.mrf.mxu0
      %v1002 = vadd.f32 %v309, %v1001
      %v1003 = vpop.f32.mrf.mxu0
      %v1004 = vadd.f32 %v309, %v1003
      %1005 = vmatmul.bf16.gmra.mxu0 %v737
      %v1006 = vpop.f32.mrf.mxu0
      %v1007 = vadd.f32 %v309, %v1006
      %v1008 = vpop.f32.mrf.mxu0
      %v1009 = vadd.f32 %v309, %v1008
      %1010 = vmatmul.bf16.gmra.mxu0 %v740
      %v1011 = vpop.f32.mrf.mxu0
      %v1012 = vadd.f32 %v309, %v1011
      %v1013 = vpop.f32.mrf.mxu0
      %v1014 = vadd.f32 %v309, %v1013
      %1015 = vmatmul.bf16.gmra.mxu0 %v743
      %v1016 = vpop.f32.mrf.mxu0
      %v1017 = vadd.f32 %v309, %v1016
      %v1018 = vpop.f32.mrf.mxu0
      %v1019 = vadd.f32 %v309, %v1018
      %1020 = vmatmul.bf16.gmra.mxu0 %v746
      %v1021 = vpop.f32.mrf.mxu0
      %v1022 = vadd.f32 %v309, %v1021
      %v1023 = vpop.f32.mrf.mxu0
      %v1024 = vadd.f32 %v309, %v1023
      %1025 = vmatmul.bf16.gmra.mxu0 %v749
      %v1026 = vpop.f32.mrf.mxu0
      %v1027 = vadd.f32 %v309, %v1026
      %v1028 = vpop.f32.mrf.mxu0
      %v1029 = vadd.f32 %v309, %v1028
      %1030 = vmatmul.bf16.gmra.mxu0 %v752
      %v1031 = vpop.f32.mrf.mxu0
      %v1032 = vadd.f32 %v309, %v1031
      %v1033 = vpop.f32.mrf.mxu0
      %v1034 = vadd.f32 %v309, %v1033
      %1035 = vmatmul.bf16.gmra.mxu0 %v755
      %v1036 = vpop.f32.mrf.mxu0
      %v1037 = vadd.f32 %v309, %v1036
      %v1038 = vpop.f32.mrf.mxu0
      %v1039 = vadd.f32 %v309, %v1038
      %1040 = vmatmul.bf16.gmra.mxu0 %v758
      %v1041 = vpop.f32.mrf.mxu0
      %v1042 = vadd.f32 %v309, %v1041
      %v1043 = vpop.f32.mrf.mxu0
      %v1044 = vadd.f32 %v309, %v1043
      %1045 = vmatmul.bf16.gmra.mxu0 %v761
      %v1046 = vpop.f32.mrf.mxu0
      %v1047 = vadd.f32 %v309, %v1046
      %v1048 = vpop.f32.mrf.mxu0
      %v1049 = vadd.f32 %v309, %v1048
      %1050 = vmatmul.bf16.gmra.mxu0 %v764
      %v1051 = vpop.f32.mrf.mxu0
      %v1052 = vadd.f32 %v309, %v1051
      %v1053 = vpop.f32.mrf.mxu0
      %v1054 = vadd.f32 %v309, %v1053
      %1055 = vmatmul.bf16.gmra.mxu0 %v767
      %v1056 = vpop.f32.mrf.mxu0
      %v1057 = vadd.f32 %v309, %v1056
      %v1058 = vpop.f32.mrf.mxu0
      %v1059 = vadd.f32 %v309, %v1058
      %1060 = vmatmul.bf16.gmra.mxu0 %v770
      %v1061 = vpop.f32.mrf.mxu0
      %v1062 = vadd.f32 %v309, %v1061
      %v1063 = vpop.f32.mrf.mxu0
      %v1064 = vadd.f32 %v309, %v1063
      %1065 = vmatmul.bf16.gmra.mxu0 %v773
      %v1066 = vpop.f32.mrf.mxu0
      %v1067 = vadd.f32 %v309, %v1066
      %v1068 = vpop.f32.mrf.mxu0
      %v1069 = vadd.f32 %v309, %v1068
      %1070 = vmatmul.bf16.gmra.mxu0 %v776
      %v1071 = vpop.f32.mrf.mxu0
      %v1072 = vadd.f32 %v309, %v1071
      %v1073 = vpop.f32.mrf.mxu0
      %v1074 = vadd.f32 %v309, %v1073
      %1075 = vmatmul.bf16.gmra.mxu0 %v779
      %v1076 = vpop.f32.mrf.mxu0
      %v1077 = vadd.f32 %v309, %v1076
      %v1078 = vpop.f32.mrf.mxu0
      %v1079 = vadd.f32 %v309, %v1078
      %1080 = vmatmul.bf16.gmra.mxu0 %v782
      %v1081 = vpop.f32.mrf.mxu0
      %v1082 = vadd.f32 %v309, %v1081
      %v1083 = vpop.f32.mrf.mxu0
      %v1084 = vadd.f32 %v309, %v1083
      %1085 = vmatmul.bf16.gmra.mxu0 %v785
      %v1086 = vpop.f32.mrf.mxu0
      %v1087 = vadd.f32 %v309, %v1086
      %v1088 = vpop.f32.mrf.mxu0
      %v1089 = vadd.f32 %v309, %v1088
      %1090 = vmatmul.bf16.gmra.mxu0 %v788
      %v1091 = vpop.f32.mrf.mxu0
      %v1092 = vadd.f32 %v309, %v1091
      %v1093 = vpop.f32.mrf.mxu0
      %v1094 = vadd.f32 %v309, %v1093
      %1095 = vmatmul.bf16.gmra.mxu0 %v791
      %v1096 = vpop.f32.mrf.mxu0
      %v1097 = vadd.f32 %v309, %v1096
      %v1098 = vpop.f32.mrf.mxu0
      %v1099 = vadd.f32 %v309, %v1098
      %1100 = vmatmul.bf16.gmra.mxu0 %v794
      %v1101 = vpop.f32.mrf.mxu0
      %v1102 = vadd.f32 %v309, %v1101
      %v1103 = vpop.f32.mrf.mxu0
      %v1104 = vadd.f32 %v309, %v1103
      %1105 = vmatmul.bf16.gmra.mxu0 %v797
      %v1106 = vpop.f32.mrf.mxu0
      %v1107 = vadd.f32 %v309, %v1106
      %v1108 = vpop.f32.mrf.mxu0
      %v1109 = vadd.f32 %v309, %v1108
      %1110 = vmatmul.bf16.gmra.mxu0 %v800
      %v1111 = vpop.f32.mrf.mxu0
      %v1112 = vadd.f32 %v309, %v1111
      %v1113 = vpop.f32.mrf.mxu0
      %v1114 = vadd.f32 %v309, %v1113
      %1115 = vmatmul.bf16.gmra.mxu0 %v803
      %v1116 = vpop.f32.mrf.mxu0
      %v1117 = vadd.f32 %v309, %v1116
      %v1118 = vpop.f32.mrf.mxu0
      %v1119 = vadd.f32 %v309, %v1118
      %1120 = vmatmul.bf16.gmra.mxu0 %v806
      %v1121 = vpop.f32.mrf.mxu0
      %v1122 = vadd.f32 %v309, %v1121
      %v1123 = vpop.f32.mrf.mxu0
      %v1124 = vadd.f32 %v309, %v1123
      %1125 = vmatmul.bf16.gmra.mxu0 %v809
      %v1126 = vpop.f32.mrf.mxu0
      %v1127 = vadd.f32 %v309, %v1126
      %v1128 = vpop.f32.mrf.mxu0
      %v1129 = vadd.f32 %v309, %v1128
      %1130 = vmatmul.bf16.gmra.mxu0 %v812
      %v1131 = vpop.f32.mrf.mxu0
      %v1132 = vadd.f32 %v309, %v1131
      %v1133 = vpop.f32.mrf.mxu0
      %v1134 = vadd.f32 %v309, %v1133
      %1135 = vmatmul.bf16.gmra.mxu0 %v815
      %v1136 = vpop.f32.mrf.mxu0
      %v1137 = vadd.f32 %v309, %v1136
      %v1138 = vpop.f32.mrf.mxu0
      %v1139 = vadd.f32 %v309, %v1138
      %1140 = vmatmul.bf16.gmra.mxu0 %v818
      %v1141 = vpop.f32.mrf.mxu0
      %v1142 = vadd.f32 %v309, %v1141
      %v1143 = vpop.f32.mrf.mxu0
      %v1144 = vadd.f32 %v309, %v1143
      %1145 = vmatmul.bf16.gmra.mxu0 %v821
      %v1146 = vpop.f32.mrf.mxu0
      %v1147 = vadd.f32 %v309, %v1146
      %v1148 = vpop.f32.mrf.mxu0
      %v1149 = vadd.f32 %v309, %v1148
      %1150 = vmatmul.bf16.gmra.mxu0 %v824
      %v1151 = vpop.f32.mrf.mxu0
      %v1152 = vadd.f32 %v309, %v1151
      %v1153 = vpop.f32.mrf.mxu0
      %v1154 = vadd.f32 %v309, %v1153
      %1155 = vmatmul.bf16.gmra.mxu0 %v827
      %v1156 = vpop.f32.mrf.mxu0
      %v1157 = vadd.f32 %v309, %v1156
      %v1158 = vpop.f32.mrf.mxu0
      %v1159 = vadd.f32 %v309, %v1158
      %1160 = vmatmul.bf16.gmra.mxu0 %v830
      %v1161 = vpop.f32.mrf.mxu0
      %v1162 = vadd.f32 %v309, %v1161
      %v1163 = vpop.f32.mrf.mxu0
      %v1164 = vadd.f32 %v309, %v1163
      %1165 = vmatmul.bf16.gmra.mxu0 %v833
      %v1166 = vpop.f32.mrf.mxu0
      %v1167 = vadd.f32 %v309, %v1166
      %v1168 = vpop.f32.mrf.mxu0
      %v1169 = vadd.f32 %v309, %v1168
      %1170 = vdwg.mxu0
      %v1171 = vmax.f32 %v852, 0.0
      %v1172 = vmax.f32 %v854, 0.0
      %v1173 = vmax.f32 %v857, 0.0
      %v1174 = vmax.f32 %v859, 0.0
      %v1175 = vmax.f32 %v862, 0.0
      %v1176 = vmax.f32 %v864, 0.0
      %v1177 = vmax.f32 %v867, 0.0
      %v1178 = vmax.f32 %v869, 0.0
      %v1179 = vmax.f32 %v872, 0.0
      %v1180 = vmax.f32 %v874, 0.0
      %v1181 = vmax.f32 %v877, 0.0
      %v1182 = vmax.f32 %v879, 0.0
      %v1183 = vmax.f32 %v882, 0.0
      %v1184 = vmax.f32 %v884, 0.0
      %v1185 = vmax.f32 %v887, 0.0
      %v1186 = vmax.f32 %v889, 0.0
      %v1187 = vmax.f32 %v892, 0.0
      %v1188 = vmax.f32 %v894, 0.0
      %v1189 = vmax.f32 %v897, 0.0
      %v1190 = vmax.f32 %v899, 0.0
      %v1191 = vmax.f32 %v902, 0.0
      %v1192 = vmax.f32 %v904, 0.0
      %v1193 = vmax.f32 %v907, 0.0
      %v1194 = vmax.f32 %v909, 0.0
      %v1195 = vmax.f32 %v912, 0.0
      %v1196 = vmax.f32 %v914, 0.0
      %v1197 = vmax.f32 %v917, 0.0
      %v1198 = vmax.f32 %v919, 0.0
      %v1199 = vmax.f32 %v922, 0.0
      %v1200 = vmax.f32 %v924, 0.0
      %v1201 = vmax.f32 %v927, 0.0
      %v1202 = vmax.f32 %v929, 0.0
      %v1203 = vmax.f32 %v932, 0.0
      %v1204 = vmax.f32 %v934, 0.0
      %v1205 = vmax.f32 %v937, 0.0
      %v1206 = vmax.f32 %v939, 0.0
      %v1207 = vmax.f32 %v942, 0.0
      %v1208 = vmax.f32 %v944, 0.0
      %v1209 = vmax.f32 %v947, 0.0
      %v1210 = vmax.f32 %v949, 0.0
      %v1211 = vmax.f32 %v952, 0.0
      %v1212 = vmax.f32 %v954, 0.0
      %v1213 = vmax.f32 %v957, 0.0
      %v1214 = vmax.f32 %v959, 0.0
      %v1215 = vmax.f32 %v962, 0.0
      %v1216 = vmax.f32 %v964, 0.0
      %v1217 = vmax.f32 %v967, 0.0
      %v1218 = vmax.f32 %v969, 0.0
      %v1219 = vmax.f32 %v972, 0.0
      %v1220 = vmax.f32 %v974, 0.0
      %v1221 = vmax.f32 %v977, 0.0
      %v1222 = vmax.f32 %v979, 0.0
      %v1223 = vmax.f32 %v982, 0.0
      %v1224 = vmax.f32 %v984, 0.0
      %v1225 = vmax.f32 %v987, 0.0
      %v1226 = vmax.f32 %v989, 0.0
      %v1227 = vmax.f32 %v992, 0.0
      %v1228 = vmax.f32 %v994, 0.0
      %v1229 = vmax.f32 %v997, 0.0
      %v1230 = vmax.f32 %v999, 0.0
      %v1231 = vmax.f32 %v1002, 0.0
      %v1232 = vmax.f32 %v1004, 0.0
      %v1233 = vmax.f32 %v1007, 0.0
      %v1234 = vmax.f32 %v1009, 0.0
      %v1235 = vmax.f32 %v1012, 0.0
      %v1236 = vmax.f32 %v1014, 0.0
      %v1237 = vmax.f32 %v1017, 0.0
      %v1238 = vmax.f32 %v1019, 0.0
      %v1239 = vmax.f32 %v1022, 0.0
      %v1240 = vmax.f32 %v1024, 0.0
      %v1241 = vmax.f32 %v1027, 0.0
      %v1242 = vmax.f32 %v1029, 0.0
      %v1243 = vmax.f32 %v1032, 0.0
      %v1244 = vmax.f32 %v1034, 0.0
      %v1245 = vmax.f32 %v1037, 0.0
      %v1246 = vmax.f32 %v1039, 0.0
      %v1247 = vmax.f32 %v1042, 0.0
      %v1248 = vmax.f32 %v1044, 0.0
      %v1249 = vmax.f32 %v1047, 0.0
      %v1250 = vmax.f32 %v1049, 0.0
      %v1251 = vmax.f32 %v1052, 0.0
      %v1252 = vmax.f32 %v1054, 0.0
      %v1253 = vmax.f32 %v1057, 0.0
      %v1254 = vmax.f32 %v1059, 0.0
      %v1255 = vmax.f32 %v1062, 0.0
      %v1256 = vmax.f32 %v1064, 0.0
      %v1257 = vmax.f32 %v1067, 0.0
      %v1258 = vmax.f32 %v1069, 0.0
      %v1259 = vmax.f32 %v1072, 0.0
      %v1260 = vmax.f32 %v1074, 0.0
      %v1261 = vmax.f32 %v1077, 0.0
      %v1262 = vmax.f32 %v1079, 0.0
      %v1263 = vmax.f32 %v1082, 0.0
      %v1264 = vmax.f32 %v1084, 0.0
      %v1265 = vmax.f32 %v1087, 0.0
      %v1266 = vmax.f32 %v1089, 0.0
      %v1267 = vmax.f32 %v1092, 0.0
      %v1268 = vmax.f32 %v1094, 0.0
      %v1269 = vmax.f32 %v1097, 0.0
      %v1270 = vmax.f32 %v1099, 0.0
      %v1271 = vmax.f32 %v1102, 0.0
      %v1272 = vmax.f32 %v1104, 0.0
      %v1273 = vmax.f32 %v1107, 0.0
      %v1274 = vmax.f32 %v1109, 0.0
      %v1275 = vmax.f32 %v1112, 0.0
      %v1276 = vmax.f32 %v1114, 0.0
      %v1277 = vmax.f32 %v1117, 0.0
      %v1278 = vmax.f32 %v1119, 0.0
      %v1279 = vmax.f32 %v1122, 0.0
      %v1280 = vmax.f32 %v1124, 0.0
      %v1281 = vmax.f32 %v1127, 0.0
      %v1282 = vmax.f32 %v1129, 0.0
      %v1283 = vmax.f32 %v1132, 0.0
      %v1284 = vmax.f32 %v1134, 0.0
      %v1285 = vmax.f32 %v1137, 0.0
      %v1286 = vmax.f32 %v1139, 0.0
      %v1287 = vmax.f32 %v1142, 0.0
      %v1288 = vmax.f32 %v1144, 0.0
      %v1289 = vmax.f32 %v1147, 0.0
      %v1290 = vmax.f32 %v1149, 0.0
      %v1291 = vmax.f32 %v1152, 0.0
      %v1292 = vmax.f32 %v1154, 0.0
      %v1293 = vmax.f32 %v1157, 0.0
      %v1294 = vmax.f32 %v1159, 0.0
      %v1295 = vmax.f32 %v1162, 0.0
      %v1296 = vmax.f32 %v1164, 0.0
      %v1297 = vmax.f32 %v1167, 0.0
      %v1298 = vmax.f32 %v1169, 0.0
      %v1299 = vpack.c.bf16 %v1171, %v1171
      %v1300 = vpack.c.bf16 %v1172, %v1172
      %v1301 = vpack.c.bf16 %v1173, %v1173
      %v1302 = vpack.c.bf16 %v1174, %v1174
      %v1303 = vpack.c.bf16 %v1175, %v1175
      %v1304 = vpack.c.bf16 %v1176, %v1176
      %v1305 = vpack.c.bf16 %v1177, %v1177
      %v1306 = vpack.c.bf16 %v1178, %v1178
      %v1307 = vpack.c.bf16 %v1179, %v1179
      %v1308 = vpack.c.bf16 %v1180, %v1180
      %v1309 = vpack.c.bf16 %v1181, %v1181
      %v1310 = vpack.c.bf16 %v1182, %v1182
      %v1311 = vpack.c.bf16 %v1183, %v1183
      %v1312 = vpack.c.bf16 %v1184, %v1184
      %v1313 = vpack.c.bf16 %v1185, %v1185
      %v1314 = vpack.c.bf16 %v1186, %v1186
      %v1315 = vpack.c.bf16 %v1187, %v1187
      %v1316 = vpack.c.bf16 %v1188, %v1188
      %v1317 = vpack.c.bf16 %v1189, %v1189
      %v1318 = vpack.c.bf16 %v1190, %v1190
      %v1319 = vpack.c.bf16 %v1191, %v1191
      %v1320 = vpack.c.bf16 %v1192, %v1192
      %v1321 = vpack.c.bf16 %v1193, %v1193
      %v1322 = vpack.c.bf16 %v1194, %v1194
      %v1323 = vpack.c.bf16 %v1195, %v1195
      %v1324 = vpack.c.bf16 %v1196, %v1196
      %v1325 = vpack.c.bf16 %v1197, %v1197
      %v1326 = vpack.c.bf16 %v1198, %v1198
      %v1327 = vpack.c.bf16 %v1199, %v1199
      %v1328 = vpack.c.bf16 %v1200, %v1200
      %v1329 = vpack.c.bf16 %v1201, %v1201
      %v1330 = vpack.c.bf16 %v1202, %v1202
      %v1331 = vpack.c.bf16 %v1203, %v1203
      %v1332 = vpack.c.bf16 %v1204, %v1204
      %v1333 = vpack.c.bf16 %v1205, %v1205
      %v1334 = vpack.c.bf16 %v1206, %v1206
      %v1335 = vpack.c.bf16 %v1207, %v1207
      %v1336 = vpack.c.bf16 %v1208, %v1208
      %v1337 = vpack.c.bf16 %v1209, %v1209
      %v1338 = vpack.c.bf16 %v1210, %v1210
      %v1339 = vpack.c.bf16 %v1211, %v1211
      %v1340 = vpack.c.bf16 %v1212, %v1212
      %v1341 = vpack.c.bf16 %v1213, %v1213
      %v1342 = vpack.c.bf16 %v1214, %v1214
      %v1343 = vpack.c.bf16 %v1215, %v1215
      %v1344 = vpack.c.bf16 %v1216, %v1216
      %v1345 = vpack.c.bf16 %v1217, %v1217
      %v1346 = vpack.c.bf16 %v1218, %v1218
      %v1347 = vpack.c.bf16 %v1219, %v1219
      %v1348 = vpack.c.bf16 %v1220, %v1220
      %v1349 = vpack.c.bf16 %v1221, %v1221
      %v1350 = vpack.c.bf16 %v1222, %v1222
      %v1351 = vpack.c.bf16 %v1223, %v1223
      %v1352 = vpack.c.bf16 %v1224, %v1224
      %v1353 = vpack.c.bf16 %v1225, %v1225
      %v1354 = vpack.c.bf16 %v1226, %v1226
      %v1355 = vpack.c.bf16 %v1227, %v1227
      %v1356 = vpack.c.bf16 %v1228, %v1228
      %v1357 = vpack.c.bf16 %v1229, %v1229
      %v1358 = vpack.c.bf16 %v1230, %v1230
      %v1359 = vpack.c.bf16 %v1231, %v1231
      %v1360 = vpack.c.bf16 %v1232, %v1232
      %v1361 = vpack.c.bf16 %v1233, %v1233
      %v1362 = vpack.c.bf16 %v1234, %v1234
      %v1363 = vpack.c.bf16 %v1235, %v1235
      %v1364 = vpack.c.bf16 %v1236, %v1236
      %v1365 = vpack.c.bf16 %v1237, %v1237
      %v1366 = vpack.c.bf16 %v1238, %v1238
      %v1367 = vpack.c.bf16 %v1239, %v1239
      %v1368 = vpack.c.bf16 %v1240, %v1240
      %v1369 = vpack.c.bf16 %v1241, %v1241
      %v1370 = vpack.c.bf16 %v1242, %v1242
      %v1371 = vpack.c.bf16 %v1243, %v1243
      %v1372 = vpack.c.bf16 %v1244, %v1244
      %v1373 = vpack.c.bf16 %v1245, %v1245
      %v1374 = vpack.c.bf16 %v1246, %v1246
      %v1375 = vpack.c.bf16 %v1247, %v1247
      %v1376 = vpack.c.bf16 %v1248, %v1248
      %v1377 = vpack.c.bf16 %v1249, %v1249
      %v1378 = vpack.c.bf16 %v1250, %v1250
      %v1379 = vpack.c.bf16 %v1251, %v1251
      %v1380 = vpack.c.bf16 %v1252, %v1252
      %v1381 = vpack.c.bf16 %v1253, %v1253
      %v1382 = vpack.c.bf16 %v1254, %v1254
      %v1383 = vpack.c.bf16 %v1255, %v1255
      %v1384 = vpack.c.bf16 %v1256, %v1256
      %v1385 = vpack.c.bf16 %v1257, %v1257
      %v1386 = vpack.c.bf16 %v1258, %v1258
      %v1387 = vpack.c.bf16 %v1259, %v1259
      %v1388 = vpack.c.bf16 %v1260, %v1260
      %v1389 = vpack.c.bf16 %v1261, %v1261
      %v1390 = vpack.c.bf16 %v1262, %v1262
      %v1391 = vpack.c.bf16 %v1263, %v1263
      %v1392 = vpack.c.bf16 %v1264, %v1264
      %v1393 = vpack.c.bf16 %v1265, %v1265
      %v1394 = vpack.c.bf16 %v1266, %v1266
      %v1395 = vpack.c.bf16 %v1267, %v1267
      %v1396 = vpack.c.bf16 %v1268, %v1268
      %v1397 = vpack.c.bf16 %v1269, %v1269
      %v1398 = vpack.c.bf16 %v1270, %v1270
      %v1399 = vpack.c.bf16 %v1271, %v1271
      %v1400 = vpack.c.bf16 %v1272, %v1272
      %v1401 = vpack.c.bf16 %v1273, %v1273
      %v1402 = vpack.c.bf16 %v1274, %v1274
      %v1403 = vpack.c.bf16 %v1275, %v1275
      %v1404 = vpack.c.bf16 %v1276, %v1276
      %v1405 = vpack.c.bf16 %v1277, %v1277
      %v1406 = vpack.c.bf16 %v1278, %v1278
      %v1407 = vpack.c.bf16 %v1279, %v1279
      %v1408 = vpack.c.bf16 %v1280, %v1280
      %v1409 = vpack.c.bf16 %v1281, %v1281
      %v1410 = vpack.c.bf16 %v1282, %v1282
      %v1411 = vpack.c.bf16 %v1283, %v1283
      %v1412 = vpack.c.bf16 %v1284, %v1284
      %v1413 = vpack.c.bf16 %v1285, %v1285
      %v1414 = vpack.c.bf16 %v1286, %v1286
      %v1415 = vpack.c.bf16 %v1287, %v1287
      %v1416 = vpack.c.bf16 %v1288, %v1288
      %v1417 = vpack.c.bf16 %v1289, %v1289
      %v1418 = vpack.c.bf16 %v1290, %v1290
      %v1419 = vpack.c.bf16 %v1291, %v1291
      %v1420 = vpack.c.bf16 %v1292, %v1292
      %v1421 = vpack.c.bf16 %v1293, %v1293
      %v1422 = vpack.c.bf16 %v1294, %v1294
      %v1423 = vpack.c.bf16 %v1295, %v1295
      %v1424 = vpack.c.bf16 %v1296, %v1296
      %v1425 = vpack.c.bf16 %v1297, %v1297
      %v1426 = vpack.c.bf16 %v1298, %v1298
      %vm1427 = vcmask 519168
      %1428 = vst.msk [vmem:[%s172] sm:$0xf] %vm1427, %v1299
      %1429 = vst.msk [vmem:[%s172 + $0x4] sm:$0xf] %vm1427, %v1300
      %1430 = vst.msk [vmem:[%s172 + $0x8] sm:$0xf] %vm1427, %v1301
      %1431 = vst.msk [vmem:[%s172 + $0xc] sm:$0xf] %vm1427, %v1302
      %1432 = vst.msk [vmem:[%s172 + $0x10] sm:$0xf] %vm1427, %v1303
      %1433 = vst.msk [vmem:[%s172 + $0x14] sm:$0xf] %vm1427, %v1304
      %1434 = vst.msk [vmem:[%s172 + $0x18] sm:$0xf] %vm1427, %v1305
      %1435 = vst.msk [vmem:[%s172 + $0x1c] sm:$0xf] %vm1427, %v1306
      %1436 = vst.msk [vmem:[%s172 + $0x20] sm:$0xf] %vm1427, %v1307
      %1437 = vst.msk [vmem:[%s172 + $0x24] sm:$0xf] %vm1427, %v1308
      %1438 = vst.msk [vmem:[%s172 + $0x28] sm:$0xf] %vm1427, %v1309
      %1439 = vst.msk [vmem:[%s172 + $0x2c] sm:$0xf] %vm1427, %v1310
      %1440 = vst.msk [vmem:[%s172 + $0x30] sm:$0xf] %vm1427, %v1311
      %1441 = vst.msk [vmem:[%s172 + $0x34] sm:$0xf] %vm1427, %v1312
      %1442 = vst.msk [vmem:[%s172 + $0x38] sm:$0xf] %vm1427, %v1313
      %1443 = vst.msk [vmem:[%s172 + $0x3c] sm:$0xf] %vm1427, %v1314
      %1444 = vst.msk [vmem:[%s172 + $0x40] sm:$0xf] %vm1427, %v1315
      %1445 = vst.msk [vmem:[%s172 + $0x44] sm:$0xf] %vm1427, %v1316
      %1446 = vst.msk [vmem:[%s172 + $0x48] sm:$0xf] %vm1427, %v1317
      %1447 = vst.msk [vmem:[%s172 + $0x4c] sm:$0xf] %vm1427, %v1318
      %1448 = vst.msk [vmem:[%s172 + $0x50] sm:$0xf] %vm1427, %v1319
      %1449 = vst.msk [vmem:[%s172 + $0x54] sm:$0xf] %vm1427, %v1320
      %1450 = vst.msk [vmem:[%s172 + $0x58] sm:$0xf] %vm1427, %v1321
      %1451 = vst.msk [vmem:[%s172 + $0x5c] sm:$0xf] %vm1427, %v1322
      %1452 = vst.msk [vmem:[%s172 + $0x60] sm:$0xf] %vm1427, %v1323
      %1453 = vst.msk [vmem:[%s172 + $0x64] sm:$0xf] %vm1427, %v1324
      %1454 = vst.msk [vmem:[%s172 + $0x68] sm:$0xf] %vm1427, %v1325
      %1455 = vst.msk [vmem:[%s172 + $0x6c] sm:$0xf] %vm1427, %v1326
      %1456 = vst.msk [vmem:[%s172 + $0x70] sm:$0xf] %vm1427, %v1327
      %1457 = vst.msk [vmem:[%s172 + $0x74] sm:$0xf] %vm1427, %v1328
      %1458 = vst.msk [vmem:[%s172 + $0x78] sm:$0xf] %vm1427, %v1329
      %1459 = vst.msk [vmem:[%s172 + $0x7c] sm:$0xf] %vm1427, %v1330
      %1460 = vst.msk [vmem:[%s172 + $0x80] sm:$0xf] %vm1427, %v1331
      %1461 = vst.msk [vmem:[%s172 + $0x84] sm:$0xf] %vm1427, %v1332
      %1462 = vst.msk [vmem:[%s172 + $0x88] sm:$0xf] %vm1427, %v1333
      %1463 = vst.msk [vmem:[%s172 + $0x8c] sm:$0xf] %vm1427, %v1334
      %1464 = vst.msk [vmem:[%s172 + $0x90] sm:$0xf] %vm1427, %v1335
      %1465 = vst.msk [vmem:[%s172 + $0x94] sm:$0xf] %vm1427, %v1336
      %1466 = vst.msk [vmem:[%s172 + $0x98] sm:$0xf] %vm1427, %v1337
      %1467 = vst.msk [vmem:[%s172 + $0x9c] sm:$0xf] %vm1427, %v1338
      %1468 = vst.msk [vmem:[%s172 + $0xa0] sm:$0xf] %vm1427, %v1339
      %1469 = vst.msk [vmem:[%s172 + $0xa4] sm:$0xf] %vm1427, %v1340
      %1470 = vst.msk [vmem:[%s172 + $0xa8] sm:$0xf] %vm1427, %v1341
      %1471 = vst.msk [vmem:[%s172 + $0xac] sm:$0xf] %vm1427, %v1342
      %1472 = vst.msk [vmem:[%s172 + $0xb0] sm:$0xf] %vm1427, %v1343
      %1473 = vst.msk [vmem:[%s172 + $0xb4] sm:$0xf] %vm1427, %v1344
      %1474 = vst.msk [vmem:[%s172 + $0xb8] sm:$0xf] %vm1427, %v1345
      %1475 = vst.msk [vmem:[%s172 + $0xbc] sm:$0xf] %vm1427, %v1346
      %1476 = vst.msk [vmem:[%s172 + $0xc0] sm:$0xf] %vm1427, %v1347
      %1477 = vst.msk [vmem:[%s172 + $0xc4] sm:$0xf] %vm1427, %v1348
      %1478 = vst.msk [vmem:[%s172 + $0xc8] sm:$0xf] %vm1427, %v1349
      %1479 = vst.msk [vmem:[%s172 + $0xcc] sm:$0xf] %vm1427, %v1350
      %1480 = vst.msk [vmem:[%s172 + $0xd0] sm:$0xf] %vm1427, %v1351
      %1481 = vst.msk [vmem:[%s172 + $0xd4] sm:$0xf] %vm1427, %v1352
      %1482 = vst.msk [vmem:[%s172 + $0xd8] sm:$0xf] %vm1427, %v1353
      %1483 = vst.msk [vmem:[%s172 + $0xdc] sm:$0xf] %vm1427, %v1354
      %1484 = vst.msk [vmem:[%s172 + $0xe0] sm:$0xf] %vm1427, %v1355
      %1485 = vst.msk [vmem:[%s172 + $0xe4] sm:$0xf] %vm1427, %v1356
      %1486 = vst.msk [vmem:[%s172 + $0xe8] sm:$0xf] %vm1427, %v1357
      %1487 = vst.msk [vmem:[%s172 + $0xec] sm:$0xf] %vm1427, %v1358
      %1488 = vst.msk [vmem:[%s172 + $0xf0] sm:$0xf] %vm1427, %v1359
      %1489 = vst.msk [vmem:[%s172 + $0xf4] sm:$0xf] %vm1427, %v1360
      %1490 = vst.msk [vmem:[%s172 + $0xf8] sm:$0xf] %vm1427, %v1361
      %1491 = vst.msk [vmem:[%s172 + $0xfc] sm:$0xf] %vm1427, %v1362
      %1492 = vst.msk [vmem:[%s172 + $0x100] sm:$0xf] %vm1427, %v1363
      %1493 = vst.msk [vmem:[%s172 + $0x104] sm:$0xf] %vm1427, %v1364
      %1494 = vst.msk [vmem:[%s172 + $0x108] sm:$0xf] %vm1427, %v1365
      %1495 = vst.msk [vmem:[%s172 + $0x10c] sm:$0xf] %vm1427, %v1366
      %1496 = vst.msk [vmem:[%s172 + $0x110] sm:$0xf] %vm1427, %v1367
      %1497 = vst.msk [vmem:[%s172 + $0x114] sm:$0xf] %vm1427, %v1368
      %1498 = vst.msk [vmem:[%s172 + $0x118] sm:$0xf] %vm1427, %v1369
      %1499 = vst.msk [vmem:[%s172 + $0x11c] sm:$0xf] %vm1427, %v1370
      %1500 = vst.msk [vmem:[%s172 + $0x120] sm:$0xf] %vm1427, %v1371
      %1501 = vst.msk [vmem:[%s172 + $0x124] sm:$0xf] %vm1427, %v1372
      %1502 = vst.msk [vmem:[%s172 + $0x128] sm:$0xf] %vm1427, %v1373
      %1503 = vst.msk [vmem:[%s172 + $0x12c] sm:$0xf] %vm1427, %v1374
      %1504 = vst.msk [vmem:[%s172 + $0x130] sm:$0xf] %vm1427, %v1375
      %1505 = vst.msk [vmem:[%s172 + $0x134] sm:$0xf] %vm1427, %v1376
      %1506 = vst.msk [vmem:[%s172 + $0x138] sm:$0xf] %vm1427, %v1377
      %1507 = vst.msk [vmem:[%s172 + $0x13c] sm:$0xf] %vm1427, %v1378
      %1508 = vst.msk [vmem:[%s172 + $0x140] sm:$0xf] %vm1427, %v1379
      %1509 = vst.msk [vmem:[%s172 + $0x144] sm:$0xf] %vm1427, %v1380
      %1510 = vst.msk [vmem:[%s172 + $0x148] sm:$0xf] %vm1427, %v1381
      %1511 = vst.msk [vmem:[%s172 + $0x14c] sm:$0xf] %vm1427, %v1382
      %1512 = vst.msk [vmem:[%s172 + $0x150] sm:$0xf] %vm1427, %v1383
      %1513 = vst.msk [vmem:[%s172 + $0x154] sm:$0xf] %vm1427, %v1384
      %1514 = vst.msk [vmem:[%s172 + $0x158] sm:$0xf] %vm1427, %v1385
      %1515 = vst.msk [vmem:[%s172 + $0x15c] sm:$0xf] %vm1427, %v1386
      %1516 = vst.msk [vmem:[%s172 + $0x160] sm:$0xf] %vm1427, %v1387
      %1517 = vst.msk [vmem:[%s172 + $0x164] sm:$0xf] %vm1427, %v1388
      %1518 = vst.msk [vmem:[%s172 + $0x168] sm:$0xf] %vm1427, %v1389
      %1519 = vst.msk [vmem:[%s172 + $0x16c] sm:$0xf] %vm1427, %v1390
      %1520 = vst.msk [vmem:[%s172 + $0x170] sm:$0xf] %vm1427, %v1391
      %1521 = vst.msk [vmem:[%s172 + $0x174] sm:$0xf] %vm1427, %v1392
      %1522 = vst.msk [vmem:[%s172 + $0x178] sm:$0xf] %vm1427, %v1393
      %1523 = vst.msk [vmem:[%s172 + $0x17c] sm:$0xf] %vm1427, %v1394
      %1524 = vst.msk [vmem:[%s172 + $0x180] sm:$0xf] %vm1427, %v1395
      %1525 = vst.msk [vmem:[%s172 + $0x184] sm:$0xf] %vm1427, %v1396
      %1526 = vst.msk [vmem:[%s172 + $0x188] sm:$0xf] %vm1427, %v1397
      %1527 = vst.msk [vmem:[%s172 + $0x18c] sm:$0xf] %vm1427, %v1398
      %1528 = vst.msk [vmem:[%s172 + $0x190] sm:$0xf] %vm1427, %v1399
      %1529 = vst.msk [vmem:[%s172 + $0x194] sm:$0xf] %vm1427, %v1400
      %1530 = vst.msk [vmem:[%s172 + $0x198] sm:$0xf] %vm1427, %v1401
      %1531 = vst.msk [vmem:[%s172 + $0x19c] sm:$0xf] %vm1427, %v1402
      %1532 = vst.msk [vmem:[%s172 + $0x1a0] sm:$0xf] %vm1427, %v1403
      %1533 = vst.msk [vmem:[%s172 + $0x1a4] sm:$0xf] %vm1427, %v1404
      %1534 = vst.msk [vmem:[%s172 + $0x1a8] sm:$0xf] %vm1427, %v1405
      %1535 = vst.msk [vmem:[%s172 + $0x1ac] sm:$0xf] %vm1427, %v1406
      %1536 = vst.msk [vmem:[%s172 + $0x1b0] sm:$0xf] %vm1427, %v1407
      %1537 = vst.msk [vmem:[%s172 + $0x1b4] sm:$0xf] %vm1427, %v1408
      %1538 = vst.msk [vmem:[%s172 + $0x1b8] sm:$0xf] %vm1427, %v1409
      %1539 = vst.msk [vmem:[%s172 + $0x1bc] sm:$0xf] %vm1427, %v1410
      %1540 = vst.msk [vmem:[%s172 + $0x1c0] sm:$0xf] %vm1427, %v1411
      %1541 = vst.msk [vmem:[%s172 + $0x1c4] sm:$0xf] %vm1427, %v1412
      %1542 = vst.msk [vmem:[%s172 + $0x1c8] sm:$0xf] %vm1427, %v1413
      %1543 = vst.msk [vmem:[%s172 + $0x1cc] sm:$0xf] %vm1427, %v1414
      %1544 = vst.msk [vmem:[%s172 + $0x1d0] sm:$0xf] %vm1427, %v1415
      %1545 = vst.msk [vmem:[%s172 + $0x1d4] sm:$0xf] %vm1427, %v1416
      %1546 = vst.msk [vmem:[%s172 + $0x1d8] sm:$0xf] %vm1427, %v1417
      %1547 = vst.msk [vmem:[%s172 + $0x1dc] sm:$0xf] %vm1427, %v1418
      %1548 = vst.msk [vmem:[%s172 + $0x1e0] sm:$0xf] %vm1427, %v1419
      %1549 = vst.msk [vmem:[%s172 + $0x1e4] sm:$0xf] %vm1427, %v1420
      %1550 = vst.msk [vmem:[%s172 + $0x1e8] sm:$0xf] %vm1427, %v1421
      %1551 = vst.msk [vmem:[%s172 + $0x1ec] sm:$0xf] %vm1427, %v1422
      %1552 = vst.msk [vmem:[%s172 + $0x1f0] sm:$0xf] %vm1427, %v1423
      %1553 = vst.msk [vmem:[%s172 + $0x1f4] sm:$0xf] %vm1427, %v1424
      %1554 = vst.msk [vmem:[%s172 + $0x1f8] sm:$0xf] %vm1427, %v1425
      %1555 = vst.msk [vmem:[%s172 + $0x1fc] sm:$0xf] %vm1427, %v1426
      %s1556 = smul.u32 128, %s14
      %p1557 = scmp.lt.s32.totalorder %s1556, 255
      %s1558 = scalar_select %p1557, %s1556, 255
      %s1559 = smul.addr %s1558, 4
      %s1560 = scalar_lea.vmem %s3, %s1559
      // Predicated region
      $region33: #{tpu_custom_call.1} parent=31 // pred_check
        %p1561 = pneg %p100
      $region34: #{tpu_custom_call.1} parent=31 // pred_check_branch
        %1563 = sbr.rel (%p1561) target = $region36
      $region35: #{tpu_custom_call.1} parent=31 // pred_region
        %s1564 = smul.u32 128, %s14
      $region36: #{tpu_custom_call.1} parent=31 // pred_fallthru
        _
    $region32: #{tpu_custom_call.1} parent=5 // pred_fallthru
      _
    %p1565 = scmp.le.s32.totalorder 2, %s9
    // Predicated region
    $region37: #{tpu_custom_call.1} parent=5 // pred_check
      %p1566 = pneg %p1565
    $region38: #{tpu_custom_call.1} parent=5 // pred_check_branch
      %1568 = sbr.rel (%p1566) target = $region40
    $region39: #{tpu_custom_call.1} parent=5 // pred_region
      %s1569 = ssub.s32 %s9, 2
      // Predicated region
      $region41: #{tpu_custom_call.1} parent=39 // pred_check
        %p1570 = pneg %p106
      $region42: #{tpu_custom_call.1} parent=39 // pred_check_branch
        %1572 = sbr.rel (%p1570) target = $region44
      $region43: #{tpu_custom_call.1} parent=39 // pred_region
        %s1573 = smul.u32 128, %s15
        %p1574 = scmp.lt.s32.totalorder %s1573, 255
        %s1575 = scalar_select %p1574, %s1573, 255
        %s1576 = smul.addr %s1575, 4
        %s1577 = scalar_lea.vmem %s3, %s1576
      $region44: #{tpu_custom_call.1} parent=39 // pred_fallthru
        _
    $region40: #{tpu_custom_call.1} parent=5 // pred_fallthru
      _
  $region6: #{tpu_custom_call.1} parent=0 // loop_footer
    %s13 = sadd.s32 1, %s9
  $region7: #{tpu_custom_call.1} parent=0 // loop_footer_branch
    %8 = sbr.rel target = $region3
  $region8: #{tpu_custom_call.1} parent=0 // loop_exit
    _

</llo_original>
